<compile_context>
chip_gen: v6e
topology: v6e:2x2x1
jax: 0.10.0
libtpu: 0.0.40
codegen_flags: <defaults>
</compile_context>

<pallas_src>
import functools

import jax
import jax.numpy as jnp
from jax.experimental import pallas as pl
from jax.experimental.pallas import tpu as pltpu

_NEG = -1e30  # finite "minus infinity" (Python float literal -> inlined, not a captured constant)


def _ginconv_kernel(adj_ref, xs_ref, xd_ref, deg_ref, wt_ref, b_ref, o_ref, acc_ref,
                    *, eps: float, apply_relu: bool):
    """One GINConv('max') + Linear (+ optional ReLU) layer, tiled over (dst, src).

    adj_ref : [Ts, Td]     adj_t[src, dst] edge weight, 0.0 where no edge (transposed adjacency)
    xs_ref  : [Ts, F_in]   features of the current src chunk (node-major, src on sublanes)
    xd_ref  : [F_in, Td]   features of the current dst tile  (feature-major)
    deg_ref : [1, Td]      in-degree of the dst tile (zero-in-degree -> 0 rule)
    wt_ref  : [F_out, F_in]  Linear weight (PyTorch [out, in] layout)
    b_ref   : [F_out, 1]     Linear bias (column, broadcasts over the lane/dst axis)
    o_ref   : [F_out, Td]    output tile (feature-major, lane-dense store)
    acc_ref : [F_in, Td]     running max accumulator (VMEM scratch)
    """
    j = pl.program_id(1)
    nj = pl.num_programs(1)

    @pl.when(j == 0)
    def _init():
        acc_ref[...] = jnp.full(acc_ref.shape, _NEG, dtype=acc_ref.dtype)

    adj_t = adj_ref[...].astype(jnp.float32)               # [Ts, Td]
    # 2-D additive edge mask, computed once per tile: 0 where an edge exists, -1e30 where absent.
    # NOTE: edges with weight exactly 0.0 are treated as absent (matches the reference encoding).
    bias = jnp.where(adj_t != 0.0, 0.0, _NEG)              # [Ts, Td]
    xs = xs_ref[...].astype(jnp.float32)                   # [Ts, F_in]

    f_in = acc_ref.shape[0]
    # Stream one 2-D [Ts, Td] slice per feature; no [F, Ts, Td] intermediate is materialized.
    for f in range(f_in):                                  # static unroll (F_in is small/static)
        xcol = xs[:, f:f + 1]                              # [Ts, 1], src on sublanes
        masked = xcol * adj_t + bias                       # [Ts, Td]  (VALU mul + add)
        cmax = jnp.max(masked, axis=0, keepdims=True)      # sublane reduce -> [1, Td]
        acc_ref[pl.ds(f, 1), :] = jnp.maximum(acc_ref[pl.ds(f, 1), :], cmax)

    @pl.when(j == nj - 1)
    def _finalize():
        xd = xd_ref[...].astype(jnp.float32)               # [F_in, Td]
        deg = deg_ref[...]                                  # [1, Td]
        neigh = jnp.where(deg > 0.0, acc_ref[...], 0.0)     # zero in-degree -> 0
        rst = (1.0 + eps) * xd + neigh                       # [F_in, Td]
        # out[c, dst] = sum_f W[c, f] * rst[f, dst]   (MXU, f32 accumulation; once per dst tile)
        out = jnp.dot(wt_ref[...], rst, preferred_element_type=jnp.float32) + b_ref[...]
        if apply_relu:
            out = jnp.maximum(out, 0.0)
        o_ref[...] = out.astype(o_ref.dtype)                # single lane-dense [F_out, Td] store


def ginconv_layer(adj_t, x_nm, x_fm, deg, w, b, *, eps=0.0, apply_relu=False,
                  block_dst=512, block_src=512):
    """adj_t: [N_pad, N_pad] (src, dst); x_nm: [N_pad, F_in]; x_fm: [F_in, N_pad];
    deg: [1, N_pad]; w: [F_out, F_in]; b: [F_out, 1].  Returns [F_out, N_pad] feature-major."""
    n_pad = adj_t.shape[0]
    f_in = x_fm.shape[0]
    f_out = w.shape[0]
    assert n_pad % block_dst == 0 and n_pad % block_src == 0
    assert x_nm.shape == (n_pad, f_in)

    grid = (n_pad // block_dst, n_pad // block_src)
    kernel = functools.partial(_ginconv_kernel, eps=eps, apply_relu=apply_relu)

    return pl.pallas_call(
        kernel,
        out_shape=jax.ShapeDtypeStruct((f_out, n_pad), jnp.float32),
        grid_spec=pltpu.PrefetchScalarGridSpec(
            num_scalar_prefetch=0,
            grid=grid,
            in_specs=[
                pl.BlockSpec((block_src, block_dst), lambda i, j: (j, i)),   # adj_t tile
                pl.BlockSpec((block_src, f_in), lambda i, j: (j, 0)),        # x src chunk (node-major)
                pl.BlockSpec((f_in, block_dst), lambda i, j: (0, i)),        # x dst tile (feature-major)
                pl.BlockSpec((1, block_dst), lambda i, j: (0, i)),           # in-degree of dst tile
                pl.BlockSpec((f_out, f_in), lambda i, j: (0, 0)),            # W (resident)
                pl.BlockSpec((f_out, 1), lambda i, j: (0, 0)),               # bias (resident)
            ],
            out_specs=pl.BlockSpec((f_out, block_dst), lambda i, j: (0, i)),
            scratch_shapes=[pltpu.VMEM((f_in, block_dst), jnp.float32)],
        ),
        compiler_params=pltpu.CompilerParams(
            dimension_semantics=("parallel", "arbitrary"),   # dst parallel (megacore), src reduce
            vmem_limit_bytes=32 * 1024 * 1024,
        ),
    )(adj_t, x_nm, x_fm, deg, w, b)


def _round_up(x, m):
    return ((x + m - 1) // m) * m


def gin_forward(adj, x, params, *, block_dst=512, block_src=512, adj_dtype=jnp.float32):
    """Full GIN forward: GINConv1 -> ReLU -> GINConv2.

    adj: [N, N] dense weighted adjacency, adj[dst, src] (0.0 == no edge).
    x:   [N, F_in] node features.
    params: w1 [H, F_in], b1 [H, 1], w2 [C, H], b2 [C, 1]  (PyTorch Linear layout).
    Returns [N, C].
    """
    assert block_dst % block_src == 0 or block_src % block_dst == 0
    n = x.shape[0]
    n_pad = _round_up(n, max(block_dst, block_src))

    # Pad / transpose once in the wrapper (cheap XLA ops); everything downstream is lane-dense.
    adj_t = jnp.zeros((n_pad, n_pad), adj_dtype).at[:n, :n].set(adj.T.astype(adj_dtype))  # [src,dst]
    # In-degree derived from the (possibly cast) adjacency so mask and degree stay consistent.
    deg = jnp.zeros((1, n_pad), jnp.float32).at[0, :n].set(
        jnp.sum((adj_t[:n, :n] != 0).astype(jnp.float32), axis=0))
    x_nm = jnp.zeros((n_pad, x.shape[1]), jnp.float32).at[:n, :].set(x)                   # [N_pad, F]
    x_fm = x_nm.T                                                                          # [F, N_pad]

    h_fm = ginconv_layer(adj_t, x_nm, x_fm, deg, params["w1"], params["b1"],
                         eps=0.0, apply_relu=True,
                         block_dst=block_dst, block_src=block_src)                         # [H, N_pad]
    h_nm = h_fm.T  # cheap XLA transpose for layer-2's node-major src path
    o_fm = ginconv_layer(adj_t, h_nm, h_fm, deg, params["w2"], params["b2"],
                         eps=0.0, apply_relu=False,
                         block_dst=block_dst, block_src=block_src)                         # [C, N_pad]
    return o_fm[:, :n].T                                                                   # [N, C]


def gin_reference(adj, x, params):
    """Pure-JAX reference with the original module's semantics (for correctness checks)."""
    mask = adj != 0.0
    deg = jnp.sum(mask, axis=1, keepdims=True)

    def layer(h, w, b, relu):
        msg = adj[:, :, None] * h[None, :, :]
        masked = jnp.where(mask[:, :, None], msg, -jnp.inf)
        neigh = jnp.max(masked, axis=1)
        neigh = jnp.where(deg > 0, neigh, 0.0)
        rst = h + neigh                      # eps = 0
        out = rst @ w.T + b.reshape(1, -1)
        return jnp.maximum(out, 0.0) if relu else out

    h = layer(x, params["w1"], params["b1"], True)
    return layer(h, params["w2"], params["b2"], False)


if __name__ == "__main__":
    key = jax.random.PRNGKey(0)
    k_feat, k_adj, k_ew, k_w1, k_b1, k_w2, k_b2 = jax.random.split(key, 7)

    # Small synthetic problem: N nodes, in_feats -> h_feats -> num_classes
    N, in_feats, h_feats, num_classes = 16, 8, 32, 4

    # Node features
    x = jax.random.normal(k_feat, (N, in_feats), dtype=jnp.float32)

    # Deterministic random directed graph, adj[dst, src]; every node has a self-edge so no
    # node has zero in-degree.  Edge weights in [0.5, 1.5]; weight 0.0 encodes "no edge".
    adj_mask = (jax.random.uniform(k_adj, (N, N)) < 0.3).astype(jnp.float32)
    adj_mask = jnp.maximum(adj_mask, jnp.eye(N, dtype=jnp.float32))
    edge_weight = jax.random.uniform(k_ew, (N, N), minval=0.5, maxval=1.5)
    adj = adj_mask * edge_weight

    # Deterministic parameter init (PyTorch nn.Linear layout: W [out, in], b [out, 1])
    params = {
        "w1": 0.1 * jax.random.normal(k_w1, (h_feats, in_feats), dtype=jnp.float32),
        "b1": 0.1 * jax.random.normal(k_b1, (h_feats, 1), dtype=jnp.float32),
        "w2": 0.1 * jax.random.normal(k_w2, (num_classes, h_feats), dtype=jnp.float32),
        "b2": 0.1 * jax.random.normal(k_b2, (num_classes, 1), dtype=jnp.float32),
    }

    # Small tiles for the tiny demo graph (production defaults are 512/512); block_src=128 with
    # n_pad=256 exercises the multi-step src reduction (init / accumulate / finalize) path.
    out = jax.block_until_ready(gin_forward(adj, x, params, block_dst=256, block_src=128))
    ref = jax.block_until_ready(gin_reference(adj, x, params))

    assert out.shape == (N, num_classes)
    assert jnp.allclose(out, ref, atol=1e-4, rtol=1e-4), (
        f"Pallas output mismatch vs reference (max abs err {jnp.max(jnp.abs(out - ref))})")

    print("KERNEL_OK")
</pallas_src>

<mosaic_0001>
module attributes {stable_mosaic.version = 11 : i64} {
  func.func @_ginconv_kernel(%arg0: i32, %arg1: i32, %arg2: memref<128x256xf32, #tpu.memory_space<vmem>>, %arg3: memref<128x8xf32, #tpu.memory_space<vmem>>, %arg4: memref<8x256xf32, #tpu.memory_space<vmem>>, %arg5: memref<1x256xf32, #tpu.memory_space<vmem>>, %arg6: memref<32x8xf32, #tpu.memory_space<vmem>>, %arg7: memref<32x1xf32, #tpu.memory_space<vmem>>, %arg8: memref<32x256xf32, #tpu.memory_space<vmem>>, %arg9: memref<8x256xf32, #tpu.memory_space<vmem>>) attributes {dimension_semantics = [#tpu.dimension_semantics<parallel>, #tpu.dimension_semantics<arbitrary>], iteration_bounds = array<i64: 1, 2>, scalar_prefetch = 0 : i64, scratch_operands = 1 : i64, tpu.core_type = #tpu.core_type<tc>, window_params = [{transform_indices = @transform_0, window_bounds = array<i64: 128, 256>}, {transform_indices = @transform_1, window_bounds = array<i64: 128, 8>}, {transform_indices = @transform_2, window_bounds = array<i64: 8, 256>}, {transform_indices = @transform_3, window_bounds = array<i64: 1, 256>}, {pipeline_mode = #tpu.pipeline_mode<synchronous>, transform_indices = @transform_4, window_bounds = array<i64: 32, 8>}, {pipeline_mode = #tpu.pipeline_mode<synchronous>, transform_indices = @transform_5, window_bounds = array<i64: 32, 1>}, {transform_indices = @transform_6, window_bounds = array<i64: 32, 256>}]} {
    %c0_i32 = arith.constant 0 : i32
    %0 = arith.cmpi eq, %arg1, %c0_i32 : i32
    %1 = arith.extui %0 : i1 to i32
    %c0_i32_0 = arith.constant 0 : i32
    %2 = arith.cmpi ne, %1, %c0_i32_0 : i32
    scf.if %2 {
      %cst_40 = arith.constant -1.000000e+30 : f32
      %85 = vector.broadcast %cst_40 : f32 to vector<8x256xf32>
      %c0_41 = arith.constant 0 : index
      %c0_42 = arith.constant 0 : index
      %86 = vector.load %arg9[%c0_41, %c0_42] : memref<8x256xf32, #tpu.memory_space<vmem>>, vector<8x256xf32>
      tpu.vector_store %arg9[%c0_41, %c0_42], %85 {strides = array<i32>} : memref<8x256xf32, #tpu.memory_space<vmem>>, vector<8x256xf32>,
    } else {
    }
    %c0 = arith.constant 0 : index
    %c0_1 = arith.constant 0 : index
    %3 = vector.load %arg2[%c0, %c0_1] : memref<128x256xf32, #tpu.memory_space<vmem>>, vector<128x256xf32>
    %cst = arith.constant 0.000000e+00 : f32
    %4 = vector.broadcast %cst : f32 to vector<128x256xf32>
    %5 = arith.cmpf one, %3, %4 : vector<128x256xf32>
    %cst_2 = arith.constant 0.000000e+00 : f32
    %cst_3 = arith.constant -1.000000e+30 : f32
    %6 = vector.broadcast %cst_2 : f32 to vector<128x256xf32>
    %7 = vector.broadcast %cst_3 : f32 to vector<128x256xf32>
    %8 = arith.select %5, %6, %7 : vector<128x256xi1>, vector<128x256xf32>
    %c0_4 = arith.constant 0 : index
    %c0_5 = arith.constant 0 : index
    %9 = vector.load %arg3[%c0_4, %c0_5] : memref<128x8xf32, #tpu.memory_space<vmem>>, vector<128x8xf32>
    %10 = vector.extract_strided_slice %9 {offsets = [0, 0], sizes = [128, 1], strides = [1, 1]} : vector<128x8xf32> to vector<128x1xf32>
    %11 = vector.broadcast %10 : vector<128x1xf32> to vector<128x256xf32>
    %12 = arith.mulf %11, %3 : vector<128x256xf32>
    %13 = arith.addf %12, %8 : vector<128x256xf32>
    %cst_6 = arith.constant dense<0xFF800000> : vector<256xf32>
    %14 = vector.multi_reduction <maximumf>, %13, %cst_6 [0] : vector<128x256xf32> to vector<256xf32>
    %15 = vector.shape_cast %14 : vector<256xf32> to vector<1x256xf32>
    %c0_7 = arith.constant 0 : index
    %c0_8 = arith.constant 0 : index
    %16 = vector.load %arg9[%c0_7, %c0_8] : memref<8x256xf32, #tpu.memory_space<vmem>>, vector<1x256xf32>
    %17 = arith.maximumf %16, %15 : vector<1x256xf32>
    %c0_9 = arith.constant 0 : index
    %c0_10 = arith.constant 0 : index
    %18 = vector.load %arg9[%c0_9, %c0_10] : memref<8x256xf32, #tpu.memory_space<vmem>>, vector<1x256xf32>
    tpu.vector_store %arg9[%c0_9, %c0_10], %17 {strides = array<i32>} : memref<8x256xf32, #tpu.memory_space<vmem>>, vector<1x256xf32>,
    %19 = vector.extract_strided_slice %9 {offsets = [0, 1], sizes = [128, 1], strides = [1, 1]} : vector<128x8xf32> to vector<128x1xf32>
    %20 = vector.broadcast %19 : vector<128x1xf32> to vector<128x256xf32>
    %21 = arith.mulf %20, %3 : vector<128x256xf32>
    %22 = arith.addf %21, %8 : vector<128x256xf32>
    %cst_11 = arith.constant dense<0xFF800000> : vector<256xf32>
    %23 = vector.multi_reduction <maximumf>, %22, %cst_11 [0] : vector<128x256xf32> to vector<256xf32>
    %24 = vector.shape_cast %23 : vector<256xf32> to vector<1x256xf32>
    %c1 = arith.constant 1 : index
    %c0_12 = arith.constant 0 : index
    %25 = vector.load %arg9[%c1, %c0_12] : memref<8x256xf32, #tpu.memory_space<vmem>>, vector<1x256xf32>
    %26 = arith.maximumf %25, %24 : vector<1x256xf32>
    %c1_13 = arith.constant 1 : index
    %c0_14 = arith.constant 0 : index
    %27 = vector.load %arg9[%c1_13, %c0_14] : memref<8x256xf32, #tpu.memory_space<vmem>>, vector<1x256xf32>
    tpu.vector_store %arg9[%c1_13, %c0_14], %26 {strides = array<i32>} : memref<8x256xf32, #tpu.memory_space<vmem>>, vector<1x256xf32>,
    %28 = vector.extract_strided_slice %9 {offsets = [0, 2], sizes = [128, 1], strides = [1, 1]} : vector<128x8xf32> to vector<128x1xf32>
    %29 = vector.broadcast %28 : vector<128x1xf32> to vector<128x256xf32>
    %30 = arith.mulf %29, %3 : vector<128x256xf32>
    %31 = arith.addf %30, %8 : vector<128x256xf32>
    %cst_15 = arith.constant dense<0xFF800000> : vector<256xf32>
    %32 = vector.multi_reduction <maximumf>, %31, %cst_15 [0] : vector<128x256xf32> to vector<256xf32>
    %33 = vector.shape_cast %32 : vector<256xf32> to vector<1x256xf32>
    %c2 = arith.constant 2 : index
    %c0_16 = arith.constant 0 : index
    %34 = vector.load %arg9[%c2, %c0_16] : memref<8x256xf32, #tpu.memory_space<vmem>>, vector<1x256xf32>
    %35 = arith.maximumf %34, %33 : vector<1x256xf32>
    %c2_17 = arith.constant 2 : index
    %c0_18 = arith.constant 0 : index
    %36 = vector.load %arg9[%c2_17, %c0_18] : memref<8x256xf32, #tpu.memory_space<vmem>>, vector<1x256xf32>
    tpu.vector_store %arg9[%c2_17, %c0_18], %35 {strides = array<i32>} : memref<8x256xf32, #tpu.memory_space<vmem>>, vector<1x256xf32>,
    %37 = vector.extract_strided_slice %9 {offsets = [0, 3], sizes = [128, 1], strides = [1, 1]} : vector<128x8xf32> to vector<128x1xf32>
    %38 = vector.broadcast %37 : vector<128x1xf32> to vector<128x256xf32>
    %39 = arith.mulf %38, %3 : vector<128x256xf32>
    %40 = arith.addf %39, %8 : vector<128x256xf32>
    %cst_19 = arith.constant dense<0xFF800000> : vector<256xf32>
    %41 = vector.multi_reduction <maximumf>, %40, %cst_19 [0] : vector<128x256xf32> to vector<256xf32>
    %42 = vector.shape_cast %41 : vector<256xf32> to vector<1x256xf32>
    %c3 = arith.constant 3 : index
    %c0_20 = arith.constant 0 : index
    %43 = vector.load %arg9[%c3, %c0_20] : memref<8x256xf32, #tpu.memory_space<vmem>>, vector<1x256xf32>
    %44 = arith.maximumf %43, %42 : vector<1x256xf32>
    %c3_21 = arith.constant 3 : index
    %c0_22 = arith.constant 0 : index
    %45 = vector.load %arg9[%c3_21, %c0_22] : memref<8x256xf32, #tpu.memory_space<vmem>>, vector<1x256xf32>
    tpu.vector_store %arg9[%c3_21, %c0_22], %44 {strides = array<i32>} : memref<8x256xf32, #tpu.memory_space<vmem>>, vector<1x256xf32>,
    %46 = vector.extract_strided_slice %9 {offsets = [0, 4], sizes = [128, 1], strides = [1, 1]} : vector<128x8xf32> to vector<128x1xf32>
    %47 = vector.broadcast %46 : vector<128x1xf32> to vector<128x256xf32>
    %48 = arith.mulf %47, %3 : vector<128x256xf32>
    %49 = arith.addf %48, %8 : vector<128x256xf32>
    %cst_23 = arith.constant dense<0xFF800000> : vector<256xf32>
    %50 = vector.multi_reduction <maximumf>, %49, %cst_23 [0] : vector<128x256xf32> to vector<256xf32>
    %51 = vector.shape_cast %50 : vector<256xf32> to vector<1x256xf32>
    %c4 = arith.constant 4 : index
    %c0_24 = arith.constant 0 : index
    %52 = vector.load %arg9[%c4, %c0_24] : memref<8x256xf32, #tpu.memory_space<vmem>>, vector<1x256xf32>
    %53 = arith.maximumf %52, %51 : vector<1x256xf32>
    %c4_25 = arith.constant 4 : index
    %c0_26 = arith.constant 0 : index
    %54 = vector.load %arg9[%c4_25, %c0_26] : memref<8x256xf32, #tpu.memory_space<vmem>>, vector<1x256xf32>
    tpu.vector_store %arg9[%c4_25, %c0_26], %53 {strides = array<i32>} : memref<8x256xf32, #tpu.memory_space<vmem>>, vector<1x256xf32>,
    %55 = vector.extract_strided_slice %9 {offsets = [0, 5], sizes = [128, 1], strides = [1, 1]} : vector<128x8xf32> to vector<128x1xf32>
    %56 = vector.broadcast %55 : vector<128x1xf32> to vector<128x256xf32>
    %57 = arith.mulf %56, %3 : vector<128x256xf32>
    %58 = arith.addf %57, %8 : vector<128x256xf32>
    %cst_27 = arith.constant dense<0xFF800000> : vector<256xf32>
    %59 = vector.multi_reduction <maximumf>, %58, %cst_27 [0] : vector<128x256xf32> to vector<256xf32>
    %60 = vector.shape_cast %59 : vector<256xf32> to vector<1x256xf32>
    %c5 = arith.constant 5 : index
    %c0_28 = arith.constant 0 : index
    %61 = vector.load %arg9[%c5, %c0_28] : memref<8x256xf32, #tpu.memory_space<vmem>>, vector<1x256xf32>
    %62 = arith.maximumf %61, %60 : vector<1x256xf32>
    %c5_29 = arith.constant 5 : index
    %c0_30 = arith.constant 0 : index
    %63 = vector.load %arg9[%c5_29, %c0_30] : memref<8x256xf32, #tpu.memory_space<vmem>>, vector<1x256xf32>
    tpu.vector_store %arg9[%c5_29, %c0_30], %62 {strides = array<i32>} : memref<8x256xf32, #tpu.memory_space<vmem>>, vector<1x256xf32>,
    %64 = vector.extract_strided_slice %9 {offsets = [0, 6], sizes = [128, 1], strides = [1, 1]} : vector<128x8xf32> to vector<128x1xf32>
    %65 = vector.broadcast %64 : vector<128x1xf32> to vector<128x256xf32>
    %66 = arith.mulf %65, %3 : vector<128x256xf32>
    %67 = arith.addf %66, %8 : vector<128x256xf32>
    %cst_31 = arith.constant dense<0xFF800000> : vector<256xf32>
    %68 = vector.multi_reduction <maximumf>, %67, %cst_31 [0] : vector<128x256xf32> to vector<256xf32>
    %69 = vector.shape_cast %68 : vector<256xf32> to vector<1x256xf32>
    %c6 = arith.constant 6 : index
    %c0_32 = arith.constant 0 : index
    %70 = vector.load %arg9[%c6, %c0_32] : memref<8x256xf32, #tpu.memory_space<vmem>>, vector<1x256xf32>
    %71 = arith.maximumf %70, %69 : vector<1x256xf32>
    %c6_33 = arith.constant 6 : index
    %c0_34 = arith.constant 0 : index
    %72 = vector.load %arg9[%c6_33, %c0_34] : memref<8x256xf32, #tpu.memory_space<vmem>>, vector<1x256xf32>
    tpu.vector_store %arg9[%c6_33, %c0_34], %71 {strides = array<i32>} : memref<8x256xf32, #tpu.memory_space<vmem>>, vector<1x256xf32>,
    %73 = vector.extract_strided_slice %9 {offsets = [0, 7], sizes = [128, 1], strides = [1, 1]} : vector<128x8xf32> to vector<128x1xf32>
    %74 = vector.broadcast %73 : vector<128x1xf32> to vector<128x256xf32>
    %75 = arith.mulf %74, %3 : vector<128x256xf32>
    %76 = arith.addf %75, %8 : vector<128x256xf32>
    %cst_35 = arith.constant dense<0xFF800000> : vector<256xf32>
    %77 = vector.multi_reduction <maximumf>, %76, %cst_35 [0] : vector<128x256xf32> to vector<256xf32>
    %78 = vector.shape_cast %77 : vector<256xf32> to vector<1x256xf32>
    %c7 = arith.constant 7 : index
    %c0_36 = arith.constant 0 : index
    %79 = vector.load %arg9[%c7, %c0_36] : memref<8x256xf32, #tpu.memory_space<vmem>>, vector<1x256xf32>
    %80 = arith.maximumf %79, %78 : vector<1x256xf32>
    %c7_37 = arith.constant 7 : index
    %c0_38 = arith.constant 0 : index
    %81 = vector.load %arg9[%c7_37, %c0_38] : memref<8x256xf32, #tpu.memory_space<vmem>>, vector<1x256xf32>
    tpu.vector_store %arg9[%c7_37, %c0_38], %80 {strides = array<i32>} : memref<8x256xf32, #tpu.memory_space<vmem>>, vector<1x256xf32>,
    %c1_i32 = arith.constant 1 : i32
    %82 = arith.cmpi eq, %arg1, %c1_i32 : i32
    %83 = arith.extui %82 : i1 to i32
    %c0_i32_39 = arith.constant 0 : i32
    %84 = arith.cmpi ne, %83, %c0_i32_39 : i32
    scf.if %84 {
      %c0_40 = arith.constant 0 : index
      %c0_41 = arith.constant 0 : index
      %85 = vector.load %arg4[%c0_40, %c0_41] : memref<8x256xf32, #tpu.memory_space<vmem>>, vector<8x256xf32>
      %c0_42 = arith.constant 0 : index
      %c0_43 = arith.constant 0 : index
      %86 = vector.load %arg5[%c0_42, %c0_43] : memref<1x256xf32, #tpu.memory_space<vmem>>, vector<1x256xf32>
      %cst_44 = arith.constant 0.000000e+00 : f32
      %87 = vector.broadcast %cst_44 : f32 to vector<1x256xf32>
      %88 = arith.cmpf ogt, %86, %87 : vector<1x256xf32>
      %c0_45 = arith.constant 0 : index
      %c0_46 = arith.constant 0 : index
      %89 = vector.load %arg9[%c0_45, %c0_46] : memref<8x256xf32, #tpu.memory_space<vmem>>, vector<8x256xf32>
      %cst_47 = arith.constant 0.000000e+00 : f32
      %90 = vector.shape_cast %88 : vector<1x256xi1> to vector<1x256xi1>
      %91 = vector.broadcast %90 : vector<1x256xi1> to vector<8x256xi1>
      %92 = vector.broadcast %cst_47 : f32 to vector<8x256xf32>
      %93 = arith.select %91, %89, %92 : vector<8x256xi1>, vector<8x256xf32>
      %cst_48 = arith.constant 1.000000e+00 : f32
      %94 = vector.broadcast %cst_48 : f32 to vector<8x256xf32>
      %95 = arith.mulf %94, %85 : vector<8x256xf32>
      %96 = arith.addf %95, %93 : vector<8x256xf32>
      %c0_49 = arith.constant 0 : index
      %c0_50 = arith.constant 0 : index
      %97 = vector.load %arg6[%c0_49, %c0_50] : memref<32x8xf32, #tpu.memory_space<vmem>>, vector<32x8xf32>
      %cst_51 = arith.constant dense<0.000000e+00> : vector<32x256xf32>
      %98 = tpu.matmul %97, %96, %cst_51 {dimension_numbers = #tpu.dot_dimension_numbers<[1], [0], [0], [1], [0, 0, 1, 1], [], []>} : vector<32x8xf32>, vector<8x256xf32>, vector<32x256xf32> -> vector<32x256xf32>
      %c0_52 = arith.constant 0 : index
      %c0_53 = arith.constant 0 : index
      %99 = vector.load %arg7[%c0_52, %c0_53] : memref<32x1xf32, #tpu.memory_space<vmem>>, vector<32x1xf32>
      %100 = vector.broadcast %99 : vector<32x1xf32> to vector<32x256xf32>
      %101 = arith.addf %98, %100 : vector<32x256xf32>
      %cst_54 = arith.constant 0.000000e+00 : f32
      %102 = vector.broadcast %cst_54 : f32 to vector<32x256xf32>
      %103 = arith.maximumf %101, %102 : vector<32x256xf32>
      %c0_55 = arith.constant 0 : index
      %c0_56 = arith.constant 0 : index
      %104 = vector.load %arg8[%c0_55, %c0_56] : memref<32x256xf32, #tpu.memory_space<vmem>>, vector<32x256xf32>
      tpu.vector_store %arg8[%c0_55, %c0_56], %103 {strides = array<i32>} : memref<32x256xf32, #tpu.memory_space<vmem>>, vector<32x256xf32>,
    } else {
    }
    return
  }
  func.func @transform_0(%arg0: i32, %arg1: i32) -> (i32, i32) {
    %c0_i32 = arith.constant 0 : i32
    return %arg1, %arg0 : i32, i32
  }
  func.func @transform_1(%arg0: i32, %arg1: i32) -> (i32, i32) {
    %c0_i32 = arith.constant 0 : i32
    %c0_i32_0 = arith.constant 0 : i32
    return %arg1, %c0_i32 : i32, i32
  }
  func.func @transform_2(%arg0: i32, %arg1: i32) -> (i32, i32) {
    %c0_i32 = arith.constant 0 : i32
    %c0_i32_0 = arith.constant 0 : i32
    return %c0_i32, %arg0 : i32, i32
  }
  func.func @transform_3(%arg0: i32, %arg1: i32) -> (i32, i32) {
    %c0_i32 = arith.constant 0 : i32
    %c0_i32_0 = arith.constant 0 : i32
    return %c0_i32, %arg0 : i32, i32
  }
  func.func @transform_4(%arg0: i32, %arg1: i32) -> (i32, i32) {
    %c0_i32 = arith.constant 0 : i32
    %c0_i32_0 = arith.constant 0 : i32
    %c0_i32_1 = arith.constant 0 : i32
    return %c0_i32, %c0_i32_0 : i32, i32
  }
  func.func @transform_5(%arg0: i32, %arg1: i32) -> (i32, i32) {
    %c0_i32 = arith.constant 0 : i32
    %c0_i32_0 = arith.constant 0 : i32
    %c0_i32_1 = arith.constant 0 : i32
    return %c0_i32, %c0_i32_0 : i32, i32
  }
  func.func @transform_6(%arg0: i32, %arg1: i32) -> (i32, i32) {
    %c0_i32 = arith.constant 0 : i32
    %c0_i32_0 = arith.constant 0 : i32
    return %c0_i32, %arg0 : i32, i32
  }
}

</mosaic_0001>

<llo_original>
// kernel: tpu_custom_call.1
$region0: #{tpu_custom_call.1}
  #allocation0 [shape = 'u32[]', space=smem, size = 0x4, offset = 0x4, fixed_abs, tag = 'smem constant byte address 0x4 - core index']
  #allocation1 [shape = 'u32[144,128]{1,0:T(1,128)}', space=vmem, size = 0x12000, scoped, tag = 'internal scratch']
  #allocation2 [shape = 'f32[8,256]{1,0:T(8,128)}', space=vmem, size = 0x2000, scoped, tag = 'scratch operand']
  %s0 = inlined_call_operand.hbm [shape: f32[256,256], index: 0, kind: input, shape index: {}]
  %s1 = inlined_call_operand.vmem [shape: f32[256,8], index: 1, kind: input, shape index: {}]
  %s2 = inlined_call_operand.vmem [shape: f32[8,256], index: 2, kind: input, shape index: {}]
  %s3 = inlined_call_operand.vmem [shape: f32[1,256], index: 3, kind: input, shape index: {}]
  %s4 = inlined_call_operand.vmem [shape: f32[32,8], index: 4, kind: input, shape index: {}]
  %s5 = inlined_call_operand.vmem [shape: f32[32,1], index: 5, kind: input, shape index: {}]
  %s6 = inlined_call_operand.hbm [shape: f32[32,256], index: 6, kind: output, shape index: {}]
  %s7 = sld [smem:[#allocation0]]
  $region69: #{tpu_custom_call.1} parent=0
    _
  %s9 = ssub.s32 1, %s7
  %s10 = scalar_select 0, %s9, %s7
  $region1: #{tpu_custom_call.1} parent=0
    #allocation3 [shape = 'u8[262144]{0}', space=vmem, size = 0x40000, scoped, tag = 'input window, operand 0']
    #allocation4 [shape = 's32[2]{0}', space=sflag, size = 0x8, scoped, tag = 'scoped memory for tpu_custom_call.1']
    #allocation5 [shape = 's32[2]{0}', space=sflag, size = 0x8, scoped, tag = 'scoped memory for tpu_custom_call.1']
    #allocation6 [shape = 'u8[32768]{0}', space=vmem, size = 0x8000, scoped, tag = 'output window, operand 0, single buffered']
    %11 = vsyncpa [#allocation4], 0
    %s12 = scalar_lea.sflag [#allocation4], 1
    %13 = vsyncpa %s12, 0
    %14 = vsyncpa [#allocation5], 0
    loop: start=0, step=1, limit=4
    $region2: #{tpu_custom_call.1} parent=1 // loop_pre_header
      _
    $region3: #{tpu_custom_call.1} parent=1 // loop_header
      %s16 = sphi 0, %s20
      %p17 = scmp.ge.s32.totalorder %s16, 4
      %s23 = sphi 0, %s35
      %s24 = sphi 0, %s31
      %s25 = sphi 0, %s23
      %s26 = sphi 0, %s24
      %s27 = sphi 0, %s25
      %s28 = sphi 0, %s26
      %s40 = sphi 0, %s42
      %s43 = sphi 0, %s40
      %s44 = sphi 0, %s43
      %s60 = sphi 0, %s44
      %s66 = sphi 0, %s68
      %s69 = sphi 0, %s66
      %s70 = sphi 0, %s69
      %s86 = sphi 0, %s70
      %s92 = sphi 0, %s94
      %s95 = sphi 0, %s92
      %s96 = sphi 0, %s95
      %s112 = sphi 0, %s96
      %s118 = sphi 0, %s120
      %s121 = sphi 0, %s118
      %s122 = sphi 0, %s121
      %s138 = sphi 0, %s122
      %s142 = sphi 0, %s142
      %s144 = sphi 0, %s142
      %s145 = sphi 0, %s144
      %s159 = sphi 0, %s145
      %s163 = sphi 0, %s163
      %s165 = sphi 0, %s163
      %s166 = sphi 0, %s165
      %s180 = sphi 0, %s166
      %s186 = sphi 0, %s188
      %s189 = sphi 0, %s186
      %s190 = sphi 0, %s189
      %s206 = sphi 0, %s190
    $region4: #{tpu_custom_call.1} parent=1 // loop_header_branch
      %19 = sbr.rel (%p17) target = $region8
    $region5: #{tpu_custom_call.1} parent=1 // loop_body
      %s21 = ssub.s32 %s16, 1
      %s22 = ssub.s32 %s16, 2
      %s29 = sadd.s32 1, %s24
      %p30 = scmp.ge.s32.totalorder %s29, 2
      %s31 = scalar_select %p30, 0, %s29
      %s32 = sadd.s32 1, %s23
      %s33 = scalar_select %p30, %s32, %s23
      %p34 = scmp.ge.s32.totalorder %s33, 1
      %s35 = scalar_select %p34, 0, %s33
      %s36 = ssub.s32 %s24, %s31
      %s37 = ssub.s32 %s23, %s35
      %s38 = sor.u32 %s36, %s37
      %p39 = scmp.eq.s32.totalorder %s38, 0
      %s41 = sadd.s32 %s40, 1
      %s42 = scalar_select %p39, %s40, %s41
      %p45 = pneg %p39
      %p46 = scmp.eq.s32.totalorder %s16, 1
      %p47 = por %p45, %p46
      %p48 = scmp.ne.s32.totalorder %s40, %s43
      %p49 = scmp.eq.s32.totalorder %s16, 0
      %p50 = por %p48, %p49
      %p51 = scmp.ne.s32.totalorder %s40, %s43
      %p52 = scmp.eq.s32.totalorder %s21, 1
      %p53 = por %p51, %p52
      %p54 = scmp.ne.s32.totalorder %s43, %s44
      %p55 = scmp.eq.s32.totalorder %s21, 0
      %p56 = por %p54, %p55
      %p57 = scmp.ne.s32.totalorder %s43, %s44
      %p58 = scmp.eq.s32.totalorder %s22, 1
      %p59 = por %p57, %p58
      %p61 = scmp.ne.s32.totalorder %s44, %s60
      %p62 = scmp.eq.s32.totalorder %s22, 0
      %p63 = por %p61, %p62
      %s64 = ssub.s32 %s24, %s31
      %p65 = scmp.eq.s32.totalorder %s64, 0
      %s67 = sadd.s32 %s66, 1
      %s68 = scalar_select %p65, %s66, %s67
      %p71 = pneg %p65
      %p72 = scmp.eq.s32.totalorder %s16, 1
      %p73 = por %p71, %p72
      %p74 = scmp.ne.s32.totalorder %s66, %s69
      %p75 = scmp.eq.s32.totalorder %s16, 0
      %p76 = por %p74, %p75
      %p77 = scmp.ne.s32.totalorder %s66, %s69
      %p78 = scmp.eq.s32.totalorder %s21, 1
      %p79 = por %p77, %p78
      %p80 = scmp.ne.s32.totalorder %s69, %s70
      %p81 = scmp.eq.s32.totalorder %s21, 0
      %p82 = por %p80, %p81
      %p83 = scmp.ne.s32.totalorder %s69, %s70
      %p84 = scmp.eq.s32.totalorder %s22, 1
      %p85 = por %p83, %p84
      %p87 = scmp.ne.s32.totalorder %s70, %s86
      %p88 = scmp.eq.s32.totalorder %s22, 0
      %p89 = por %p87, %p88
      %s90 = ssub.s32 %s23, %s35
      %p91 = scmp.eq.s32.totalorder %s90, 0
      %s93 = sadd.s32 %s92, 1
      %s94 = scalar_select %p91, %s92, %s93
      %p97 = pneg %p91
      %p98 = scmp.eq.s32.totalorder %s16, 1
      %p99 = por %p97, %p98
      %p100 = scmp.ne.s32.totalorder %s92, %s95
      %p101 = scmp.eq.s32.totalorder %s16, 0
      %p102 = por %p100, %p101
      %p103 = scmp.ne.s32.totalorder %s92, %s95
      %p104 = scmp.eq.s32.totalorder %s21, 1
      %p105 = por %p103, %p104
      %p106 = scmp.ne.s32.totalorder %s95, %s96
      %p107 = scmp.eq.s32.totalorder %s21, 0
      %p108 = por %p106, %p107
      %p109 = scmp.ne.s32.totalorder %s95, %s96
      %p110 = scmp.eq.s32.totalorder %s22, 1
      %p111 = por %p109, %p110
      %p113 = scmp.ne.s32.totalorder %s96, %s112
      %p114 = scmp.eq.s32.totalorder %s22, 0
      %p115 = por %p113, %p114
      %s116 = ssub.s32 %s23, %s35
      %p117 = scmp.eq.s32.totalorder %s116, 0
      %s119 = sadd.s32 %s118, 1
      %s120 = scalar_select %p117, %s118, %s119
      %p123 = pneg %p117
      %p124 = scmp.eq.s32.totalorder %s16, 1
      %p125 = por %p123, %p124
      %p126 = scmp.ne.s32.totalorder %s118, %s121
      %p127 = scmp.eq.s32.totalorder %s16, 0
      %p128 = por %p126, %p127
      %p129 = scmp.ne.s32.totalorder %s118, %s121
      %p130 = scmp.eq.s32.totalorder %s21, 1
      %p131 = por %p129, %p130
      %p132 = scmp.ne.s32.totalorder %s121, %s122
      %p133 = scmp.eq.s32.totalorder %s21, 0
      %p134 = por %p132, %p133
      %p135 = scmp.ne.s32.totalorder %s121, %s122
      %p136 = scmp.eq.s32.totalorder %s22, 1
      %p137 = por %p135, %p136
      %p139 = scmp.ne.s32.totalorder %s122, %s138
      %p140 = scmp.eq.s32.totalorder %s22, 0
      %p141 = por %p139, %p140
      %s143 = sadd.s32 %s142, 1
      %p146 = scmp.eq.s32.totalorder %s16, 1
      %p147 = scmp.ne.s32.totalorder %s142, %s144
      %p148 = scmp.eq.s32.totalorder %s16, 0
      %p149 = por %p147, %p148
      %p150 = scmp.ne.s32.totalorder %s142, %s144
      %p151 = scmp.eq.s32.totalorder %s21, 1
      %p152 = por %p150, %p151
      %p153 = scmp.ne.s32.totalorder %s144, %s145
      %p154 = scmp.eq.s32.totalorder %s21, 0
      %p155 = por %p153, %p154
      %p156 = scmp.ne.s32.totalorder %s144, %s145
      %p157 = scmp.eq.s32.totalorder %s22, 1
      %p158 = por %p156, %p157
      %p160 = scmp.ne.s32.totalorder %s145, %s159
      %p161 = scmp.eq.s32.totalorder %s22, 0
      %p162 = por %p160, %p161
      %s164 = sadd.s32 %s163, 1
      %p167 = scmp.eq.s32.totalorder %s16, 1
      %p168 = scmp.ne.s32.totalorder %s163, %s165
      %p169 = scmp.eq.s32.totalorder %s16, 0
      %p170 = por %p168, %p169
      %p171 = scmp.ne.s32.totalorder %s163, %s165
      %p172 = scmp.eq.s32.totalorder %s21, 1
      %p173 = por %p171, %p172
      %p174 = scmp.ne.s32.totalorder %s165, %s166
      %p175 = scmp.eq.s32.totalorder %s21, 0
      %p176 = por %p174, %p175
      %p177 = scmp.ne.s32.totalorder %s165, %s166
      %p178 = scmp.eq.s32.totalorder %s22, 1
      %p179 = por %p177, %p178
      %p181 = scmp.ne.s32.totalorder %s166, %s180
      %p182 = scmp.eq.s32.totalorder %s22, 0
      %p183 = por %p181, %p182
      %s184 = ssub.s32 %s23, %s35
      %p185 = scmp.eq.s32.totalorder %s184, 0
      %s187 = sadd.s32 %s186, 1
      %s188 = scalar_select %p185, %s186, %s187
      %p191 = pneg %p185
      %p192 = scmp.eq.s32.totalorder %s16, 1
      %p193 = por %p191, %p192
      %p194 = scmp.ne.s32.totalorder %s186, %s189
      %p195 = scmp.eq.s32.totalorder %s16, 0
      %p196 = por %p194, %p195
      %p197 = scmp.ne.s32.totalorder %s186, %s189
      %p198 = scmp.eq.s32.totalorder %s21, 1
      %p199 = por %p197, %p198
      %p200 = scmp.ne.s32.totalorder %s189, %s190
      %p201 = scmp.eq.s32.totalorder %s21, 0
      %p202 = por %p200, %p201
      %p203 = scmp.ne.s32.totalorder %s189, %s190
      %p204 = scmp.eq.s32.totalorder %s22, 1
      %p205 = por %p203, %p204
      %p207 = scmp.ne.s32.totalorder %s190, %s206
      %p208 = scmp.eq.s32.totalorder %s22, 0
      %p209 = por %p207, %p208
      %p210 = scmp.le.s32.totalorder 1, %s16
      %p211 = scmp.lt.s32.totalorder %s16, 3
      %p212 = pnand %p210, %p211
      %p213 = pneg %p212
      // Predicated region
      $region9: #{tpu_custom_call.1} parent=5 // pred_check
        _
      $region10: #{tpu_custom_call.1} parent=5 // pred_check_branch
        %215 = sbr.rel (%p212) target = $region12
      $region11: #{tpu_custom_call.1} parent=5 // pred_region
        %s216 = ssub.s32 %s16, 1
        // Predicated region
        $region13: #{tpu_custom_call.1} parent=11 // pred_check
          %p217 = pneg %p108
        $region14: #{tpu_custom_call.1} parent=11 // pred_check_branch
          %219 = sbr.rel (%p217) target = $region16
        $region15: #{tpu_custom_call.1} parent=11 // pred_region
          %s220 = smul.u32 2, %s25
          %p221 = scmp.lt.s32.totalorder %s220, 1
          %s222 = scalar_select %p221, %s220, 1
          %s223 = smul.addr %s222, 8
          %s224 = scalar_lea.vmem %s2, %s223
          %s225 = smul.u32 2, %s25
        $region16: #{tpu_custom_call.1} parent=11 // pred_fallthru
          _
        // Predicated region
        $region17: #{tpu_custom_call.1} parent=11 // pred_check
          %p226 = pneg %p134
        $region18: #{tpu_custom_call.1} parent=11 // pred_check_branch
          %228 = sbr.rel (%p226) target = $region20
        $region19: #{tpu_custom_call.1} parent=11 // pred_region
          %s229 = smul.u32 2, %s25
          %p230 = scmp.lt.s32.totalorder %s229, 1
          %s231 = scalar_select %p230, %s229, 1
          %s232 = scalar_lea.vmem %s3, %s231
          %s233 = smul.u32 2, %s25
        $region20: #{tpu_custom_call.1} parent=11 // pred_fallthru
          _
        // Predicated region
        $region21: #{tpu_custom_call.1} parent=11 // pred_check
          %p234 = pneg %p155
        $region22: #{tpu_custom_call.1} parent=11 // pred_check_branch
          %236 = sbr.rel (%p234) target = $region24
        $region23: #{tpu_custom_call.1} parent=11 // pred_region
          _
        $region24: #{tpu_custom_call.1} parent=11 // pred_fallthru
          _
        // Predicated region
        $region25: #{tpu_custom_call.1} parent=11 // pred_check
          %p237 = pneg %p176
        $region26: #{tpu_custom_call.1} parent=11 // pred_check_branch
          %239 = sbr.rel (%p237) target = $region28
        $region27: #{tpu_custom_call.1} parent=11 // pred_region
          _
        $region28: #{tpu_custom_call.1} parent=11 // pred_fallthru
          _
      $region12: #{tpu_custom_call.1} parent=5 // pred_fallthru
        _
      %p240 = scmp.lt.s32.totalorder %s16, 2
      // Predicated region
      $region29: #{tpu_custom_call.1} parent=5 // pred_check
        %p241 = pneg %p240
      $region30: #{tpu_custom_call.1} parent=5 // pred_check_branch
        %243 = sbr.rel (%p241) target = $region32
      $region31: #{tpu_custom_call.1} parent=5 // pred_region
        // Predicated region
        $region33: #{tpu_custom_call.1} parent=31 // pred_check
          %p244 = pneg %p50
        $region34: #{tpu_custom_call.1} parent=31 // pred_check_branch
          %246 = sbr.rel (%p244) target = $region36
        $region35: #{tpu_custom_call.1} parent=31 // pred_region
          %s247 = sand.u32 %s40, 1
          %s248 = scalar_lea.sflag [#allocation4], %s247
          %s249 = sand.u32 %s40, 1
          %s250 = smul.addr %s249, 256
          %s251 = scalar_lea.vmem [#allocation3], %s250
          %s252 = smul.u32 16, %s24
          %s253 = smul.u32 2, %s23
          %s255 = ssub.s32 4096, 4096
          %256 = vsyncadd %s248, %s255
          %s257 = smul.addr %s252, 2
          %s258 = sadd.s32 %s253, %s257
          %s259 = smul.addr %s258, 128
          %s260 = scalar_lea.hbm %s0, %s259
          %s261 = sshll.u32 %s251, 4
          %s262 = int_to_ptr.vmem [resolvable:$true] %s261
          %267 = dma.hbm_to_vmem [thread:$0]  %s260, 4096, %s262, %s248, 256, 256, 16
        $region36: #{tpu_custom_call.1} parent=31 // pred_fallthru
          _
        // Predicated region
        $region37: #{tpu_custom_call.1} parent=31 // pred_check
          %p268 = pneg %p76
        $region38: #{tpu_custom_call.1} parent=31 // pred_check_branch
          %270 = sbr.rel (%p268) target = $region40
        $region39: #{tpu_custom_call.1} parent=31 // pred_region
          %s271 = smul.u32 16, %s24
          %p272 = scmp.lt.s32.totalorder %s271, 31
          %s273 = scalar_select %p272, %s271, 31
          %s274 = smul.addr %s273, 8
          %s275 = scalar_lea.vmem %s1, %s274
          %s276 = smul.u32 16, %s24
        $region40: #{tpu_custom_call.1} parent=31 // pred_fallthru
          _
      $region32: #{tpu_custom_call.1} parent=5 // pred_fallthru
        _
      %p277 = scmp.le.s32.totalorder 1, %s16
      %p278 = scmp.lt.s32.totalorder %s16, 3
      %p279 = pnand %p277, %p278
      %p280 = pneg %p279
      // Predicated region
      $region41: #{tpu_custom_call.1} parent=5 // pred_check
        _
      $region42: #{tpu_custom_call.1} parent=5 // pred_check_branch
        %282 = sbr.rel (%p279) target = $region44
      $region43: #{tpu_custom_call.1} parent=5 // pred_region
        %s283 = ssub.s32 %s16, 1
        %s284 = sand.u32 %s43, 1
        %s285 = scalar_lea.sflag [#allocation4], %s284
        %s286 = sand.u32 %s43, 1
        %s287 = smul.addr %s286, 256
        %s288 = scalar_lea.vmem [#allocation3], %s287
        // Predicated region
        $region45: #{tpu_custom_call.1} parent=43 // pred_check
          %p289 = pneg %p56
        $region46: #{tpu_custom_call.1} parent=43 // pred_check_branch
          %291 = sbr.rel (%p289) target = $region48
        $region47: #{tpu_custom_call.1} parent=43 // pred_region
          %292 = dma.done %s285, 4096
        $region48: #{tpu_custom_call.1} parent=43 // pred_fallthru
          _
        %s293 = sand.u32 %s43, 1
        %s294 = scalar_lea.sflag [#allocation4], %s293
        %s295 = sand.u32 %s43, 1
        %s296 = smul.addr %s295, 256
        %s297 = scalar_lea.vmem [#allocation3], %s296
        %p298 = pneg %p56
        %p299 = pneg %p53
        %s300 = smul.u32 16, %s26
        %p301 = scmp.lt.s32.totalorder %s300, 31
        %s302 = scalar_select %p301, %s300, 31
        %s303 = smul.addr %s302, 8
        %s304 = scalar_lea.vmem %s1, %s303
        %p305 = pneg %p82
        %p306 = pneg %p79
        %s307 = smul.u32 2, %s25
        %p308 = scmp.lt.s32.totalorder %s307, 1
        %s309 = scalar_select %p308, %s307, 1
        %s310 = smul.addr %s309, 8
        %s311 = scalar_lea.vmem %s2, %s310
        %p312 = pneg %p108
        %p313 = pneg %p105
        %s314 = smul.u32 2, %s25
        %p315 = scmp.lt.s32.totalorder %s314, 1
        %s316 = scalar_select %p315, %s314, 1
        %s317 = scalar_lea.vmem %s3, %s316
        %p318 = pneg %p134
        %p319 = pneg %p131
        %p320 = pneg %p155
        %p321 = pneg %p152
        %p322 = pneg %p176
        %p323 = pneg %p173
        %p324 = pneg %p202
        %p325 = pneg %p199
        %s326 = smul.u32 16, %s26
        %s327 = smul.u32 2, %s25
        %s328 = smul.u32 16, %s26
        %p329 = scmp.lt.s32.totalorder %s328, 31
        %s330 = scalar_select %p329, %s328, 31
        %s331 = smul.addr %s330, 8
        %s332 = scalar_lea.vmem %s1, %s331
        %s333 = smul.u32 16, %s26
        %s334 = smul.u32 2, %s25
        %p335 = scmp.lt.s32.totalorder %s334, 1
        %s336 = scalar_select %p335, %s334, 1
        %s337 = smul.addr %s336, 8
        %s338 = scalar_lea.vmem %s2, %s337
        %s339 = smul.u32 2, %s25
        %s340 = smul.u32 2, %s25
        %p341 = scmp.lt.s32.totalorder %s340, 1
        %s342 = scalar_select %p341, %s340, 1
        %s343 = scalar_lea.vmem %s3, %s342
        %s344 = smul.u32 2, %s25
        %s345 = smul.u32 2, %s25
        %p346 = scmp.eq.s32.totalorder %s26, 0
        // Predicated region
        $region49: #{tpu_custom_call.1} parent=43 // pred_check
          %p347 = pneg %p346
        $region50: #{tpu_custom_call.1} parent=43 // pred_check_branch
          %349 = sbr.rel (%p347) target = $region52
        $region51: #{tpu_custom_call.1} parent=43 // pred_region
          %350 = vst [vmem:[#allocation2] sm:$0xff] -1e+30
          %351 = vst [vmem:[#allocation2 + $0x8] sm:$0xff] -1e+30
        $region52: #{tpu_custom_call.1} parent=43 // pred_fallthru
          _
        %v352 = vld [vmem:[%s288] sm:$0xff]
        %v353 = vld [vmem:[%s288 + $0x8] sm:$0xff]
        %v354 = vld [vmem:[%s288 + $0x10] sm:$0xff]
        %v355 = vld [vmem:[%s288 + $0x18] sm:$0xff]
        %v356 = vld [vmem:[%s288 + $0x20] sm:$0xff]
        %v357 = vld [vmem:[%s288 + $0x28] sm:$0xff]
        %v358 = vld [vmem:[%s288 + $0x30] sm:$0xff]
        %v359 = vld [vmem:[%s288 + $0x38] sm:$0xff]
        %v360 = vld [vmem:[%s288 + $0x40] sm:$0xff]
        %v361 = vld [vmem:[%s288 + $0x48] sm:$0xff]
        %v362 = vld [vmem:[%s288 + $0x50] sm:$0xff]
        %v363 = vld [vmem:[%s288 + $0x58] sm:$0xff]
        %v364 = vld [vmem:[%s288 + $0x60] sm:$0xff]
        %v365 = vld [vmem:[%s288 + $0x68] sm:$0xff]
        %v366 = vld [vmem:[%s288 + $0x70] sm:$0xff]
        %v367 = vld [vmem:[%s288 + $0x78] sm:$0xff]
        %v368 = vld [vmem:[%s288 + $0x80] sm:$0xff]
        %v369 = vld [vmem:[%s288 + $0x88] sm:$0xff]
        %v370 = vld [vmem:[%s288 + $0x90] sm:$0xff]
        %v371 = vld [vmem:[%s288 + $0x98] sm:$0xff]
        %v372 = vld [vmem:[%s288 + $0xa0] sm:$0xff]
        %v373 = vld [vmem:[%s288 + $0xa8] sm:$0xff]
        %v374 = vld [vmem:[%s288 + $0xb0] sm:$0xff]
        %v375 = vld [vmem:[%s288 + $0xb8] sm:$0xff]
        %v376 = vld [vmem:[%s288 + $0xc0] sm:$0xff]
        %v377 = vld [vmem:[%s288 + $0xc8] sm:$0xff]
        %v378 = vld [vmem:[%s288 + $0xd0] sm:$0xff]
        %v379 = vld [vmem:[%s288 + $0xd8] sm:$0xff]
        %v380 = vld [vmem:[%s288 + $0xe0] sm:$0xff]
        %v381 = vld [vmem:[%s288 + $0xe8] sm:$0xff]
        %v382 = vld [vmem:[%s288 + $0xf0] sm:$0xff]
        %v383 = vld [vmem:[%s288 + $0xf8] sm:$0xff]
        %vm384 = vcmp.ne.f32.partialorder %v352, 0.0
        %vm385 = vcmp.ne.f32.partialorder %v353, 0.0
        %vm386 = vcmp.ne.f32.partialorder %v354, 0.0
        %vm387 = vcmp.ne.f32.partialorder %v355, 0.0
        %vm388 = vcmp.ne.f32.partialorder %v356, 0.0
        %vm389 = vcmp.ne.f32.partialorder %v357, 0.0
        %vm390 = vcmp.ne.f32.partialorder %v358, 0.0
        %vm391 = vcmp.ne.f32.partialorder %v359, 0.0
        %vm392 = vcmp.ne.f32.partialorder %v360, 0.0
        %vm393 = vcmp.ne.f32.partialorder %v361, 0.0
        %vm394 = vcmp.ne.f32.partialorder %v362, 0.0
        %vm395 = vcmp.ne.f32.partialorder %v363, 0.0
        %vm396 = vcmp.ne.f32.partialorder %v364, 0.0
        %vm397 = vcmp.ne.f32.partialorder %v365, 0.0
        %vm398 = vcmp.ne.f32.partialorder %v366, 0.0
        %vm399 = vcmp.ne.f32.partialorder %v367, 0.0
        %vm400 = vcmp.ne.f32.partialorder %v368, 0.0
        %vm401 = vcmp.ne.f32.partialorder %v369, 0.0
        %vm402 = vcmp.ne.f32.partialorder %v370, 0.0
        %vm403 = vcmp.ne.f32.partialorder %v371, 0.0
        %vm404 = vcmp.ne.f32.partialorder %v372, 0.0
        %vm405 = vcmp.ne.f32.partialorder %v373, 0.0
        %vm406 = vcmp.ne.f32.partialorder %v374, 0.0
        %vm407 = vcmp.ne.f32.partialorder %v375, 0.0
        %vm408 = vcmp.ne.f32.partialorder %v376, 0.0
        %vm409 = vcmp.ne.f32.partialorder %v377, 0.0
        %vm410 = vcmp.ne.f32.partialorder %v378, 0.0
        %vm411 = vcmp.ne.f32.partialorder %v379, 0.0
        %vm412 = vcmp.ne.f32.partialorder %v380, 0.0
        %vm413 = vcmp.ne.f32.partialorder %v381, 0.0
        %vm414 = vcmp.ne.f32.partialorder %v382, 0.0
        %vm415 = vcmp.ne.f32.partialorder %v383, 0.0
        %v416 = vsel %vm384, 0.0, -1e+30
        %v417 = vsel %vm385, 0.0, -1e+30
        %v418 = vsel %vm386, 0.0, -1e+30
        %v419 = vsel %vm387, 0.0, -1e+30
        %v420 = vsel %vm388, 0.0, -1e+30
        %v421 = vsel %vm389, 0.0, -1e+30
        %v422 = vsel %vm390, 0.0, -1e+30
        %v423 = vsel %vm391, 0.0, -1e+30
        %v424 = vsel %vm392, 0.0, -1e+30
        %v425 = vsel %vm393, 0.0, -1e+30
        %v426 = vsel %vm394, 0.0, -1e+30
        %v427 = vsel %vm395, 0.0, -1e+30
        %v428 = vsel %vm396, 0.0, -1e+30
        %v429 = vsel %vm397, 0.0, -1e+30
        %v430 = vsel %vm398, 0.0, -1e+30
        %v431 = vsel %vm399, 0.0, -1e+30
        %v432 = vsel %vm400, 0.0, -1e+30
        %v433 = vsel %vm401, 0.0, -1e+30
        %v434 = vsel %vm402, 0.0, -1e+30
        %v435 = vsel %vm403, 0.0, -1e+30
        %v436 = vsel %vm404, 0.0, -1e+30
        %v437 = vsel %vm405, 0.0, -1e+30
        %v438 = vsel %vm406, 0.0, -1e+30
        %v439 = vsel %vm407, 0.0, -1e+30
        %v440 = vsel %vm408, 0.0, -1e+30
        %v441 = vsel %vm409, 0.0, -1e+30
        %v442 = vsel %vm410, 0.0, -1e+30
        %v443 = vsel %vm411, 0.0, -1e+30
        %v444 = vsel %vm412, 0.0, -1e+30
        %v445 = vsel %vm413, 0.0, -1e+30
        %v446 = vsel %vm414, 0.0, -1e+30
        %v447 = vsel %vm415, 0.0, -1e+30
        %v448 = vld [vmem:[%s332] sm:$0xff]
        %v449 = vld [vmem:[%s332 + $0x8] sm:$0xff]
        %v450 = vld [vmem:[%s332 + $0x10] sm:$0xff]
        %v451 = vld [vmem:[%s332 + $0x18] sm:$0xff]
        %v452 = vld [vmem:[%s332 + $0x20] sm:$0xff]
        %v453 = vld [vmem:[%s332 + $0x28] sm:$0xff]
        %v454 = vld [vmem:[%s332 + $0x30] sm:$0xff]
        %v455 = vld [vmem:[%s332 + $0x38] sm:$0xff]
        %v456 = vld [vmem:[%s332 + $0x40] sm:$0xff]
        %v457 = vld [vmem:[%s332 + $0x48] sm:$0xff]
        %v458 = vld [vmem:[%s332 + $0x50] sm:$0xff]
        %v459 = vld [vmem:[%s332 + $0x58] sm:$0xff]
        %v460 = vld [vmem:[%s332 + $0x60] sm:$0xff]
        %v461 = vld [vmem:[%s332 + $0x68] sm:$0xff]
        %v462 = vld [vmem:[%s332 + $0x70] sm:$0xff]
        %v463 = vld [vmem:[%s332 + $0x78] sm:$0xff]
        %465 = vset.pattern.permute.xlu0 0
        %466 = vperm.xlu0 %465, %v448
        %v467 = vpop.permute.xlu0 %466
        %470 = vset.pattern.permute.xlu0 0
        %471 = vperm.xlu0 %470, %v449
        %v472 = vpop.permute.xlu0 %471
        %475 = vset.pattern.permute.xlu0 0
        %476 = vperm.xlu0 %475, %v450
        %v477 = vpop.permute.xlu0 %476
        %480 = vset.pattern.permute.xlu0 0
        %481 = vperm.xlu0 %480, %v451
        %v482 = vpop.permute.xlu0 %481
        %485 = vset.pattern.permute.xlu0 0
        %486 = vperm.xlu0 %485, %v452
        %v487 = vpop.permute.xlu0 %486
        %490 = vset.pattern.permute.xlu0 0
        %491 = vperm.xlu0 %490, %v453
        %v492 = vpop.permute.xlu0 %491
        %495 = vset.pattern.permute.xlu0 0
        %496 = vperm.xlu0 %495, %v454
        %v497 = vpop.permute.xlu0 %496
        %500 = vset.pattern.permute.xlu0 0
        %501 = vperm.xlu0 %500, %v455
        %v502 = vpop.permute.xlu0 %501
        %505 = vset.pattern.permute.xlu0 0
        %506 = vperm.xlu0 %505, %v456
        %v507 = vpop.permute.xlu0 %506
        %510 = vset.pattern.permute.xlu0 0
        %511 = vperm.xlu0 %510, %v457
        %v512 = vpop.permute.xlu0 %511
        %515 = vset.pattern.permute.xlu0 0
        %516 = vperm.xlu0 %515, %v458
        %v517 = vpop.permute.xlu0 %516
        %520 = vset.pattern.permute.xlu0 0
        %521 = vperm.xlu0 %520, %v459
        %v522 = vpop.permute.xlu0 %521
        %525 = vset.pattern.permute.xlu0 0
        %526 = vperm.xlu0 %525, %v460
        %v527 = vpop.permute.xlu0 %526
        %530 = vset.pattern.permute.xlu0 0
        %531 = vperm.xlu0 %530, %v461
        %v532 = vpop.permute.xlu0 %531
        %535 = vset.pattern.permute.xlu0 0
        %536 = vperm.xlu0 %535, %v462
        %v537 = vpop.permute.xlu0 %536
        %540 = vset.pattern.permute.xlu0 0
        %541 = vperm.xlu0 %540, %v463
        %v542 = vpop.permute.xlu0 %541
        %v544 = vmul.f32 %v467, %v352
        %v545 = vmul.f32 %v467, %v353
        %v546 = vmul.f32 %v472, %v354
        %v547 = vmul.f32 %v472, %v355
        %v548 = vmul.f32 %v477, %v356
        %v549 = vmul.f32 %v477, %v357
        %v550 = vmul.f32 %v482, %v358
        %v551 = vmul.f32 %v482, %v359
        %v552 = vmul.f32 %v487, %v360
        %v553 = vmul.f32 %v487, %v361
        %v554 = vmul.f32 %v492, %v362
        %v555 = vmul.f32 %v492, %v363
        %v556 = vmul.f32 %v497, %v364
        %v557 = vmul.f32 %v497, %v365
        %v558 = vmul.f32 %v502, %v366
        %v559 = vmul.f32 %v502, %v367
        %v560 = vmul.f32 %v507, %v368
        %v561 = vmul.f32 %v507, %v369
        %v562 = vmul.f32 %v512, %v370
        %v563 = vmul.f32 %v512, %v371
        %v564 = vmul.f32 %v517, %v372
        %v565 = vmul.f32 %v517, %v373
        %v566 = vmul.f32 %v522, %v374
        %v567 = vmul.f32 %v522, %v375
        %v568 = vmul.f32 %v527, %v376
        %v569 = vmul.f32 %v527, %v377
        %v570 = vmul.f32 %v532, %v378
        %v571 = vmul.f32 %v532, %v379
        %v572 = vmul.f32 %v537, %v380
        %v573 = vmul.f32 %v537, %v381
        %v574 = vmul.f32 %v542, %v382
        %v575 = vmul.f32 %v542, %v383
        %v576 = vadd.f32 %v544, %v416
        %v577 = vadd.f32 %v545, %v417
        %v578 = vadd.f32 %v546, %v418
        %v579 = vadd.f32 %v547, %v419
        %v580 = vadd.f32 %v548, %v420
        %v581 = vadd.f32 %v549, %v421
        %v582 = vadd.f32 %v550, %v422
        %v583 = vadd.f32 %v551, %v423
        %v584 = vadd.f32 %v552, %v424
        %v585 = vadd.f32 %v553, %v425
        %v586 = vadd.f32 %v554, %v426
        %v587 = vadd.f32 %v555, %v427
        %v588 = vadd.f32 %v556, %v428
        %v589 = vadd.f32 %v557, %v429
        %v590 = vadd.f32 %v558, %v430
        %v591 = vadd.f32 %v559, %v431
        %v592 = vadd.f32 %v560, %v432
        %v593 = vadd.f32 %v561, %v433
        %v594 = vadd.f32 %v562, %v434
        %v595 = vadd.f32 %v563, %v435
        %v596 = vadd.f32 %v564, %v436
        %v597 = vadd.f32 %v565, %v437
        %v598 = vadd.f32 %v566, %v438
        %v599 = vadd.f32 %v567, %v439
        %v600 = vadd.f32 %v568, %v440
        %v601 = vadd.f32 %v569, %v441
        %v602 = vadd.f32 %v570, %v442
        %v603 = vadd.f32 %v571, %v443
        %v604 = vadd.f32 %v572, %v444
        %v605 = vadd.f32 %v573, %v445
        %v606 = vadd.f32 %v574, %v446
        %v607 = vadd.f32 %v575, %v447
        %v608 = vmax.f32 %v576, %v580
        %v609 = vmax.f32 %v578, %v582
        %v610 = vmax.f32 %v608, %v584
        %v611 = vmax.f32 %v609, %v586
        %v612 = vmax.f32 %v610, %v588
        %v613 = vmax.f32 %v611, %v590
        %v614 = vmax.f32 %v612, %v592
        %v615 = vmax.f32 %v613, %v594
        %v616 = vmax.f32 %v614, %v596
        %v617 = vmax.f32 %v615, %v598
        %v618 = vmax.f32 %v616, %v600
        %v619 = vmax.f32 %v617, %v602
        %v620 = vmax.f32 %v618, %v604
        %v621 = vmax.f32 %v619, %v606
        %v622 = vmax.f32 %v620, %v621
        %v623 = vrot.slane %v622, 4
        %v624 = vmax.f32 %v622, %v623
        %v625 = vrot.slane %v624, 2
        %v626 = vmax.f32 %v624, %v625
        %v627 = vrot.slane %v626, 1
        %v628 = vmax.f32 %v626, %v627
        %v629 = vmax.f32 %v577, %v581
        %v630 = vmax.f32 %v579, %v583
        %v631 = vmax.f32 %v629, %v585
        %v632 = vmax.f32 %v630, %v587
        %v633 = vmax.f32 %v631, %v589
        %v634 = vmax.f32 %v632, %v591
        %v635 = vmax.f32 %v633, %v593
        %v636 = vmax.f32 %v634, %v595
        %v637 = vmax.f32 %v635, %v597
        %v638 = vmax.f32 %v636, %v599
        %v639 = vmax.f32 %v637, %v601
        %v640 = vmax.f32 %v638, %v603
        %v641 = vmax.f32 %v639, %v605
        %v642 = vmax.f32 %v640, %v607
        %v643 = vmax.f32 %v641, %v642
        %v644 = vrot.slane %v643, 4
        %v645 = vmax.f32 %v643, %v644
        %v646 = vrot.slane %v645, 2
        %v647 = vmax.f32 %v645, %v646
        %v648 = vrot.slane %v647, 1
        %v649 = vmax.f32 %v647, %v648
        %v650 = vld [vmem:[#allocation2] ss:$8 sm:$0x3]
        %v653 = vcombine.low %v628, %v649
        %v655 = vunpack.c.l.s4 1966171168
        %v656 = vunpack.c.0.s8 %v655
        %v657 = vlaneseq
        %v658 = vshrl.u32 %v657, 7
        %v659 = vsub.s32 %v656, %v658
        %v660 = vrot.slane %v653, %v659
        %v662 = vunpack.c.l.s4 1966171168
        %v663 = vunpack.c.0.s8 %v662
        %v664 = vlaneseq
        %v665 = vshrl.u32 %v664, 7
        %v666 = vsub.s32 %v663, %v665
        %v667 = vrot.slane %v660, %v666
        %v669 = vmax.f32 %v650, %v667
        %v670 = vlaneseq
        %vm671 = vcmp.ge.s32.totalorder %v670, 0
        %vm672 = vcmp.lt.s32.totalorder %v670, 256
        %vm673 = vmand %vm671, %vm672
        %674 = vst.msk [vmem:[#allocation2] ss:$8 sm:$0x3] %vm673, %v669
        %675 = vst.msk [vmem:[#allocation2] ss:$8 sm:$0x0] %vm673, %v669
        %676 = vset.pattern.permute.xlu0 1
        %677 = vperm.xlu0 %676, %v448
        %v678 = vpop.permute.xlu0 %677
        %680 = vset.pattern.permute.xlu0 1
        %681 = vperm.xlu0 %680, %v449
        %v682 = vpop.permute.xlu0 %681
        %684 = vset.pattern.permute.xlu0 1
        %685 = vperm.xlu0 %684, %v450
        %v686 = vpop.permute.xlu0 %685
        %688 = vset.pattern.permute.xlu0 1
        %689 = vperm.xlu0 %688, %v451
        %v690 = vpop.permute.xlu0 %689
        %692 = vset.pattern.permute.xlu0 1
        %693 = vperm.xlu0 %692, %v452
        %v694 = vpop.permute.xlu0 %693
        %696 = vset.pattern.permute.xlu0 1
        %697 = vperm.xlu0 %696, %v453
        %v698 = vpop.permute.xlu0 %697
        %700 = vset.pattern.permute.xlu0 1
        %701 = vperm.xlu0 %700, %v454
        %v702 = vpop.permute.xlu0 %701
        %704 = vset.pattern.permute.xlu0 1
        %705 = vperm.xlu0 %704, %v455
        %v706 = vpop.permute.xlu0 %705
        %708 = vset.pattern.permute.xlu0 1
        %709 = vperm.xlu0 %708, %v456
        %v710 = vpop.permute.xlu0 %709
        %712 = vset.pattern.permute.xlu0 1
        %713 = vperm.xlu0 %712, %v457
        %v714 = vpop.permute.xlu0 %713
        %716 = vset.pattern.permute.xlu0 1
        %717 = vperm.xlu0 %716, %v458
        %v718 = vpop.permute.xlu0 %717
        %720 = vset.pattern.permute.xlu0 1
        %721 = vperm.xlu0 %720, %v459
        %v722 = vpop.permute.xlu0 %721
        %724 = vset.pattern.permute.xlu0 1
        %725 = vperm.xlu0 %724, %v460
        %v726 = vpop.permute.xlu0 %725
        %728 = vset.pattern.permute.xlu0 1
        %729 = vperm.xlu0 %728, %v461
        %v730 = vpop.permute.xlu0 %729
        %732 = vset.pattern.permute.xlu0 1
        %733 = vperm.xlu0 %732, %v462
        %v734 = vpop.permute.xlu0 %733
        %736 = vset.pattern.permute.xlu0 1
        %737 = vperm.xlu0 %736, %v463
        %v738 = vpop.permute.xlu0 %737
        %v740 = vmul.f32 %v678, %v352
        %v741 = vmul.f32 %v678, %v353
        %v742 = vmul.f32 %v682, %v354
        %v743 = vmul.f32 %v682, %v355
        %v744 = vmul.f32 %v686, %v356
        %v745 = vmul.f32 %v686, %v357
        %v746 = vmul.f32 %v690, %v358
        %v747 = vmul.f32 %v690, %v359
        %v748 = vmul.f32 %v694, %v360
        %v749 = vmul.f32 %v694, %v361
        %v750 = vmul.f32 %v698, %v362
        %v751 = vmul.f32 %v698, %v363
        %v752 = vmul.f32 %v702, %v364
        %v753 = vmul.f32 %v702, %v365
        %v754 = vmul.f32 %v706, %v366
        %v755 = vmul.f32 %v706, %v367
        %v756 = vmul.f32 %v710, %v368
        %v757 = vmul.f32 %v710, %v369
        %v758 = vmul.f32 %v714, %v370
        %v759 = vmul.f32 %v714, %v371
        %v760 = vmul.f32 %v718, %v372
        %v761 = vmul.f32 %v718, %v373
        %v762 = vmul.f32 %v722, %v374
        %v763 = vmul.f32 %v722, %v375
        %v764 = vmul.f32 %v726, %v376
        %v765 = vmul.f32 %v726, %v377
        %v766 = vmul.f32 %v730, %v378
        %v767 = vmul.f32 %v730, %v379
        %v768 = vmul.f32 %v734, %v380
        %v769 = vmul.f32 %v734, %v381
        %v770 = vmul.f32 %v738, %v382
        %v771 = vmul.f32 %v738, %v383
        %v772 = vadd.f32 %v740, %v416
        %v773 = vadd.f32 %v741, %v417
        %v774 = vadd.f32 %v742, %v418
        %v775 = vadd.f32 %v743, %v419
        %v776 = vadd.f32 %v744, %v420
        %v777 = vadd.f32 %v745, %v421
        %v778 = vadd.f32 %v746, %v422
        %v779 = vadd.f32 %v747, %v423
        %v780 = vadd.f32 %v748, %v424
        %v781 = vadd.f32 %v749, %v425
        %v782 = vadd.f32 %v750, %v426
        %v783 = vadd.f32 %v751, %v427
        %v784 = vadd.f32 %v752, %v428
        %v785 = vadd.f32 %v753, %v429
        %v786 = vadd.f32 %v754, %v430
        %v787 = vadd.f32 %v755, %v431
        %v788 = vadd.f32 %v756, %v432
        %v789 = vadd.f32 %v757, %v433
        %v790 = vadd.f32 %v758, %v434
        %v791 = vadd.f32 %v759, %v435
        %v792 = vadd.f32 %v760, %v436
        %v793 = vadd.f32 %v761, %v437
        %v794 = vadd.f32 %v762, %v438
        %v795 = vadd.f32 %v763, %v439
        %v796 = vadd.f32 %v764, %v440
        %v797 = vadd.f32 %v765, %v441
        %v798 = vadd.f32 %v766, %v442
        %v799 = vadd.f32 %v767, %v443
        %v800 = vadd.f32 %v768, %v444
        %v801 = vadd.f32 %v769, %v445
        %v802 = vadd.f32 %v770, %v446
        %v803 = vadd.f32 %v771, %v447
        %v804 = vmax.f32 %v772, %v776
        %v805 = vmax.f32 %v774, %v778
        %v806 = vmax.f32 %v804, %v780
        %v807 = vmax.f32 %v805, %v782
        %v808 = vmax.f32 %v806, %v784
        %v809 = vmax.f32 %v807, %v786
        %v810 = vmax.f32 %v808, %v788
        %v811 = vmax.f32 %v809, %v790
        %v812 = vmax.f32 %v810, %v792
        %v813 = vmax.f32 %v811, %v794
        %v814 = vmax.f32 %v812, %v796
        %v815 = vmax.f32 %v813, %v798
        %v816 = vmax.f32 %v814, %v800
        %v817 = vmax.f32 %v815, %v802
        %v818 = vmax.f32 %v816, %v817
        %v819 = vrot.slane %v818, 4
        %v820 = vmax.f32 %v818, %v819
        %v821 = vrot.slane %v820, 2
        %v822 = vmax.f32 %v820, %v821
        %v823 = vrot.slane %v822, 1
        %v824 = vmax.f32 %v822, %v823
        %v825 = vmax.f32 %v773, %v777
        %v826 = vmax.f32 %v775, %v779
        %v827 = vmax.f32 %v825, %v781
        %v828 = vmax.f32 %v826, %v783
        %v829 = vmax.f32 %v827, %v785
        %v830 = vmax.f32 %v828, %v787
        %v831 = vmax.f32 %v829, %v789
        %v832 = vmax.f32 %v830, %v791
        %v833 = vmax.f32 %v831, %v793
        %v834 = vmax.f32 %v832, %v795
        %v835 = vmax.f32 %v833, %v797
        %v836 = vmax.f32 %v834, %v799
        %v837 = vmax.f32 %v835, %v801
        %v838 = vmax.f32 %v836, %v803
        %v839 = vmax.f32 %v837, %v838
        %v840 = vrot.slane %v839, 4
        %v841 = vmax.f32 %v839, %v840
        %v842 = vrot.slane %v841, 2
        %v843 = vmax.f32 %v841, %v842
        %v844 = vrot.slane %v843, 1
        %v845 = vmax.f32 %v843, %v844
        %s846 = scalar_lea.vmem [#allocation2], 1
        %v847 = vld [vmem:[%s846] ss:$8 sm:$0x3]
        %v850 = vcombine.low %v824, %v845
        %v852 = vunpack.c.l.s4 1966171168
        %v853 = vunpack.c.0.s8 %v852
        %v854 = vlaneseq
        %v855 = vshrl.u32 %v854, 7
        %v856 = vsub.s32 %v853, %v855
        %v857 = vrot.slane %v850, %v856
        %v859 = vunpack.c.l.s4 1966171168
        %v860 = vunpack.c.0.s8 %v859
        %v861 = vlaneseq
        %v862 = vshrl.u32 %v861, 7
        %v863 = vsub.s32 %v860, %v862
        %v864 = vrot.slane %v857, %v863
        %v866 = vmax.f32 %v847, %v864
        %867 = vst.msk [vmem:[%s846] ss:$8 sm:$0x3] %vm673, %v866
        %868 = vst.msk [vmem:[%s846] ss:$8 sm:$0x0] %vm673, %v866
        %869 = vset.pattern.permute.xlu0 2
        %870 = vperm.xlu0 %869, %v448
        %v871 = vpop.permute.xlu0 %870
        %873 = vset.pattern.permute.xlu0 2
        %874 = vperm.xlu0 %873, %v449
        %v875 = vpop.permute.xlu0 %874
        %877 = vset.pattern.permute.xlu0 2
        %878 = vperm.xlu0 %877, %v450
        %v879 = vpop.permute.xlu0 %878
        %881 = vset.pattern.permute.xlu0 2
        %882 = vperm.xlu0 %881, %v451
        %v883 = vpop.permute.xlu0 %882
        %885 = vset.pattern.permute.xlu0 2
        %886 = vperm.xlu0 %885, %v452
        %v887 = vpop.permute.xlu0 %886
        %889 = vset.pattern.permute.xlu0 2
        %890 = vperm.xlu0 %889, %v453
        %v891 = vpop.permute.xlu0 %890
        %893 = vset.pattern.permute.xlu0 2
        %894 = vperm.xlu0 %893, %v454
        %v895 = vpop.permute.xlu0 %894
        %897 = vset.pattern.permute.xlu0 2
        %898 = vperm.xlu0 %897, %v455
        %v899 = vpop.permute.xlu0 %898
        %901 = vset.pattern.permute.xlu0 2
        %902 = vperm.xlu0 %901, %v456
        %v903 = vpop.permute.xlu0 %902
        %905 = vset.pattern.permute.xlu0 2
        %906 = vperm.xlu0 %905, %v457
        %v907 = vpop.permute.xlu0 %906
        %909 = vset.pattern.permute.xlu0 2
        %910 = vperm.xlu0 %909, %v458
        %v911 = vpop.permute.xlu0 %910
        %913 = vset.pattern.permute.xlu0 2
        %914 = vperm.xlu0 %913, %v459
        %v915 = vpop.permute.xlu0 %914
        %917 = vset.pattern.permute.xlu0 2
        %918 = vperm.xlu0 %917, %v460
        %v919 = vpop.permute.xlu0 %918
        %921 = vset.pattern.permute.xlu0 2
        %922 = vperm.xlu0 %921, %v461
        %v923 = vpop.permute.xlu0 %922
        %925 = vset.pattern.permute.xlu0 2
        %926 = vperm.xlu0 %925, %v462
        %v927 = vpop.permute.xlu0 %926
        %929 = vset.pattern.permute.xlu0 2
        %930 = vperm.xlu0 %929, %v463
        %v931 = vpop.permute.xlu0 %930
        %v933 = vmul.f32 %v871, %v352
        %v934 = vmul.f32 %v871, %v353
        %v935 = vmul.f32 %v875, %v354
        %v936 = vmul.f32 %v875, %v355
        %v937 = vmul.f32 %v879, %v356
        %v938 = vmul.f32 %v879, %v357
        %v939 = vmul.f32 %v883, %v358
        %v940 = vmul.f32 %v883, %v359
        %v941 = vmul.f32 %v887, %v360
        %v942 = vmul.f32 %v887, %v361
        %v943 = vmul.f32 %v891, %v362
        %v944 = vmul.f32 %v891, %v363
        %v945 = vmul.f32 %v895, %v364
        %v946 = vmul.f32 %v895, %v365
        %v947 = vmul.f32 %v899, %v366
        %v948 = vmul.f32 %v899, %v367
        %v949 = vmul.f32 %v903, %v368
        %v950 = vmul.f32 %v903, %v369
        %v951 = vmul.f32 %v907, %v370
        %v952 = vmul.f32 %v907, %v371
        %v953 = vmul.f32 %v911, %v372
        %v954 = vmul.f32 %v911, %v373
        %v955 = vmul.f32 %v915, %v374
        %v956 = vmul.f32 %v915, %v375
        %v957 = vmul.f32 %v919, %v376
        %v958 = vmul.f32 %v919, %v377
        %v959 = vmul.f32 %v923, %v378
        %v960 = vmul.f32 %v923, %v379
        %v961 = vmul.f32 %v927, %v380
        %v962 = vmul.f32 %v927, %v381
        %v963 = vmul.f32 %v931, %v382
        %v964 = vmul.f32 %v931, %v383
        %v965 = vadd.f32 %v933, %v416
        %v966 = vadd.f32 %v934, %v417
        %v967 = vadd.f32 %v935, %v418
        %v968 = vadd.f32 %v936, %v419
        %v969 = vadd.f32 %v937, %v420
        %v970 = vadd.f32 %v938, %v421
        %v971 = vadd.f32 %v939, %v422
        %v972 = vadd.f32 %v940, %v423
        %v973 = vadd.f32 %v941, %v424
        %v974 = vadd.f32 %v942, %v425
        %v975 = vadd.f32 %v943, %v426
        %v976 = vadd.f32 %v944, %v427
        %v977 = vadd.f32 %v945, %v428
        %v978 = vadd.f32 %v946, %v429
        %v979 = vadd.f32 %v947, %v430
        %v980 = vadd.f32 %v948, %v431
        %v981 = vadd.f32 %v949, %v432
        %v982 = vadd.f32 %v950, %v433
        %v983 = vadd.f32 %v951, %v434
        %v984 = vadd.f32 %v952, %v435
        %v985 = vadd.f32 %v953, %v436
        %v986 = vadd.f32 %v954, %v437
        %v987 = vadd.f32 %v955, %v438
        %v988 = vadd.f32 %v956, %v439
        %v989 = vadd.f32 %v957, %v440
        %v990 = vadd.f32 %v958, %v441
        %v991 = vadd.f32 %v959, %v442
        %v992 = vadd.f32 %v960, %v443
        %v993 = vadd.f32 %v961, %v444
        %v994 = vadd.f32 %v962, %v445
        %v995 = vadd.f32 %v963, %v446
        %v996 = vadd.f32 %v964, %v447
        %v997 = vmax.f32 %v965, %v969
        %v998 = vmax.f32 %v967, %v971
        %v999 = vmax.f32 %v997, %v973
        %v1000 = vmax.f32 %v998, %v975
        %v1001 = vmax.f32 %v999, %v977
        %v1002 = vmax.f32 %v1000, %v979
        %v1003 = vmax.f32 %v1001, %v981
        %v1004 = vmax.f32 %v1002, %v983
        %v1005 = vmax.f32 %v1003, %v985
        %v1006 = vmax.f32 %v1004, %v987
        %v1007 = vmax.f32 %v1005, %v989
        %v1008 = vmax.f32 %v1006, %v991
        %v1009 = vmax.f32 %v1007, %v993
        %v1010 = vmax.f32 %v1008, %v995
        %v1011 = vmax.f32 %v1009, %v1010
        %v1012 = vrot.slane %v1011, 4
        %v1013 = vmax.f32 %v1011, %v1012
        %v1014 = vrot.slane %v1013, 2
        %v1015 = vmax.f32 %v1013, %v1014
        %v1016 = vrot.slane %v1015, 1
        %v1017 = vmax.f32 %v1015, %v1016
        %v1018 = vmax.f32 %v966, %v970
        %v1019 = vmax.f32 %v968, %v972
        %v1020 = vmax.f32 %v1018, %v974
        %v1021 = vmax.f32 %v1019, %v976
        %v1022 = vmax.f32 %v1020, %v978
        %v1023 = vmax.f32 %v1021, %v980
        %v1024 = vmax.f32 %v1022, %v982
        %v1025 = vmax.f32 %v1023, %v984
        %v1026 = vmax.f32 %v1024, %v986
        %v1027 = vmax.f32 %v1025, %v988
        %v1028 = vmax.f32 %v1026, %v990
        %v1029 = vmax.f32 %v1027, %v992
        %v1030 = vmax.f32 %v1028, %v994
        %v1031 = vmax.f32 %v1029, %v996
        %v1032 = vmax.f32 %v1030, %v1031
        %v1033 = vrot.slane %v1032, 4
        %v1034 = vmax.f32 %v1032, %v1033
        %v1035 = vrot.slane %v1034, 2
        %v1036 = vmax.f32 %v1034, %v1035
        %v1037 = vrot.slane %v1036, 1
        %v1038 = vmax.f32 %v1036, %v1037
        %s1039 = scalar_lea.vmem [#allocation2], 2
        %v1040 = vld [vmem:[%s1039] ss:$8 sm:$0x3]
        %v1043 = vcombine.low %v1017, %v1038
        %v1045 = vunpack.c.l.s4 1966171168
        %v1046 = vunpack.c.0.s8 %v1045
        %v1047 = vlaneseq
        %v1048 = vshrl.u32 %v1047, 7
        %v1049 = vsub.s32 %v1046, %v1048
        %v1050 = vrot.slane %v1043, %v1049
        %v1052 = vunpack.c.l.s4 1966171168
        %v1053 = vunpack.c.0.s8 %v1052
        %v1054 = vlaneseq
        %v1055 = vshrl.u32 %v1054, 7
        %v1056 = vsub.s32 %v1053, %v1055
        %v1057 = vrot.slane %v1050, %v1056
        %v1059 = vmax.f32 %v1040, %v1057
        %1060 = vst.msk [vmem:[%s1039] ss:$8 sm:$0x3] %vm673, %v1059
        %1061 = vst.msk [vmem:[%s1039] ss:$8 sm:$0x0] %vm673, %v1059
        %1062 = vset.pattern.permute.xlu0 3
        %1063 = vperm.xlu0 %1062, %v448
        %v1064 = vpop.permute.xlu0 %1063
        %1066 = vset.pattern.permute.xlu0 3
        %1067 = vperm.xlu0 %1066, %v449
        %v1068 = vpop.permute.xlu0 %1067
        %1070 = vset.pattern.permute.xlu0 3
        %1071 = vperm.xlu0 %1070, %v450
        %v1072 = vpop.permute.xlu0 %1071
        %1074 = vset.pattern.permute.xlu0 3
        %1075 = vperm.xlu0 %1074, %v451
        %v1076 = vpop.permute.xlu0 %1075
        %1078 = vset.pattern.permute.xlu0 3
        %1079 = vperm.xlu0 %1078, %v452
        %v1080 = vpop.permute.xlu0 %1079
        %1082 = vset.pattern.permute.xlu0 3
        %1083 = vperm.xlu0 %1082, %v453
        %v1084 = vpop.permute.xlu0 %1083
        %1086 = vset.pattern.permute.xlu0 3
        %1087 = vperm.xlu0 %1086, %v454
        %v1088 = vpop.permute.xlu0 %1087
        %1090 = vset.pattern.permute.xlu0 3
        %1091 = vperm.xlu0 %1090, %v455
        %v1092 = vpop.permute.xlu0 %1091
        %1094 = vset.pattern.permute.xlu0 3
        %1095 = vperm.xlu0 %1094, %v456
        %v1096 = vpop.permute.xlu0 %1095
        %1098 = vset.pattern.permute.xlu0 3
        %1099 = vperm.xlu0 %1098, %v457
        %v1100 = vpop.permute.xlu0 %1099
        %1102 = vset.pattern.permute.xlu0 3
        %1103 = vperm.xlu0 %1102, %v458
        %v1104 = vpop.permute.xlu0 %1103
        %1106 = vset.pattern.permute.xlu0 3
        %1107 = vperm.xlu0 %1106, %v459
        %v1108 = vpop.permute.xlu0 %1107
        %1110 = vset.pattern.permute.xlu0 3
        %1111 = vperm.xlu0 %1110, %v460
        %v1112 = vpop.permute.xlu0 %1111
        %1114 = vset.pattern.permute.xlu0 3
        %1115 = vperm.xlu0 %1114, %v461
        %v1116 = vpop.permute.xlu0 %1115
        %1118 = vset.pattern.permute.xlu0 3
        %1119 = vperm.xlu0 %1118, %v462
        %v1120 = vpop.permute.xlu0 %1119
        %1122 = vset.pattern.permute.xlu0 3
        %1123 = vperm.xlu0 %1122, %v463
        %v1124 = vpop.permute.xlu0 %1123
        %v1126 = vmul.f32 %v1064, %v352
        %v1127 = vmul.f32 %v1064, %v353
        %v1128 = vmul.f32 %v1068, %v354
        %v1129 = vmul.f32 %v1068, %v355
        %v1130 = vmul.f32 %v1072, %v356
        %v1131 = vmul.f32 %v1072, %v357
        %v1132 = vmul.f32 %v1076, %v358
        %v1133 = vmul.f32 %v1076, %v359
        %v1134 = vmul.f32 %v1080, %v360
        %v1135 = vmul.f32 %v1080, %v361
        %v1136 = vmul.f32 %v1084, %v362
        %v1137 = vmul.f32 %v1084, %v363
        %v1138 = vmul.f32 %v1088, %v364
        %v1139 = vmul.f32 %v1088, %v365
        %v1140 = vmul.f32 %v1092, %v366
        %v1141 = vmul.f32 %v1092, %v367
        %v1142 = vmul.f32 %v1096, %v368
        %v1143 = vmul.f32 %v1096, %v369
        %v1144 = vmul.f32 %v1100, %v370
        %v1145 = vmul.f32 %v1100, %v371
        %v1146 = vmul.f32 %v1104, %v372
        %v1147 = vmul.f32 %v1104, %v373
        %v1148 = vmul.f32 %v1108, %v374
        %v1149 = vmul.f32 %v1108, %v375
        %v1150 = vmul.f32 %v1112, %v376
        %v1151 = vmul.f32 %v1112, %v377
        %v1152 = vmul.f32 %v1116, %v378
        %v1153 = vmul.f32 %v1116, %v379
        %v1154 = vmul.f32 %v1120, %v380
        %v1155 = vmul.f32 %v1120, %v381
        %v1156 = vmul.f32 %v1124, %v382
        %v1157 = vmul.f32 %v1124, %v383
        %v1158 = vadd.f32 %v1126, %v416
        %v1159 = vadd.f32 %v1127, %v417
        %v1160 = vadd.f32 %v1128, %v418
        %v1161 = vadd.f32 %v1129, %v419
        %v1162 = vadd.f32 %v1130, %v420
        %v1163 = vadd.f32 %v1131, %v421
        %v1164 = vadd.f32 %v1132, %v422
        %v1165 = vadd.f32 %v1133, %v423
        %v1166 = vadd.f32 %v1134, %v424
        %v1167 = vadd.f32 %v1135, %v425
        %v1168 = vadd.f32 %v1136, %v426
        %v1169 = vadd.f32 %v1137, %v427
        %v1170 = vadd.f32 %v1138, %v428
        %v1171 = vadd.f32 %v1139, %v429
        %v1172 = vadd.f32 %v1140, %v430
        %v1173 = vadd.f32 %v1141, %v431
        %v1174 = vadd.f32 %v1142, %v432
        %v1175 = vadd.f32 %v1143, %v433
        %v1176 = vadd.f32 %v1144, %v434
        %v1177 = vadd.f32 %v1145, %v435
        %v1178 = vadd.f32 %v1146, %v436
        %v1179 = vadd.f32 %v1147, %v437
        %v1180 = vadd.f32 %v1148, %v438
        %v1181 = vadd.f32 %v1149, %v439
        %v1182 = vadd.f32 %v1150, %v440
        %v1183 = vadd.f32 %v1151, %v441
        %v1184 = vadd.f32 %v1152, %v442
        %v1185 = vadd.f32 %v1153, %v443
        %v1186 = vadd.f32 %v1154, %v444
        %v1187 = vadd.f32 %v1155, %v445
        %v1188 = vadd.f32 %v1156, %v446
        %v1189 = vadd.f32 %v1157, %v447
        %v1190 = vmax.f32 %v1158, %v1162
        %v1191 = vmax.f32 %v1160, %v1164
        %v1192 = vmax.f32 %v1190, %v1166
        %v1193 = vmax.f32 %v1191, %v1168
        %v1194 = vmax.f32 %v1192, %v1170
        %v1195 = vmax.f32 %v1193, %v1172
        %v1196 = vmax.f32 %v1194, %v1174
        %v1197 = vmax.f32 %v1195, %v1176
        %v1198 = vmax.f32 %v1196, %v1178
        %v1199 = vmax.f32 %v1197, %v1180
        %v1200 = vmax.f32 %v1198, %v1182
        %v1201 = vmax.f32 %v1199, %v1184
        %v1202 = vmax.f32 %v1200, %v1186
        %v1203 = vmax.f32 %v1201, %v1188
        %v1204 = vmax.f32 %v1202, %v1203
        %v1205 = vrot.slane %v1204, 4
        %v1206 = vmax.f32 %v1204, %v1205
        %v1207 = vrot.slane %v1206, 2
        %v1208 = vmax.f32 %v1206, %v1207
        %v1209 = vrot.slane %v1208, 1
        %v1210 = vmax.f32 %v1208, %v1209
        %v1211 = vmax.f32 %v1159, %v1163
        %v1212 = vmax.f32 %v1161, %v1165
        %v1213 = vmax.f32 %v1211, %v1167
        %v1214 = vmax.f32 %v1212, %v1169
        %v1215 = vmax.f32 %v1213, %v1171
        %v1216 = vmax.f32 %v1214, %v1173
        %v1217 = vmax.f32 %v1215, %v1175
        %v1218 = vmax.f32 %v1216, %v1177
        %v1219 = vmax.f32 %v1217, %v1179
        %v1220 = vmax.f32 %v1218, %v1181
        %v1221 = vmax.f32 %v1219, %v1183
        %v1222 = vmax.f32 %v1220, %v1185
        %v1223 = vmax.f32 %v1221, %v1187
        %v1224 = vmax.f32 %v1222, %v1189
        %v1225 = vmax.f32 %v1223, %v1224
        %v1226 = vrot.slane %v1225, 4
        %v1227 = vmax.f32 %v1225, %v1226
        %v1228 = vrot.slane %v1227, 2
        %v1229 = vmax.f32 %v1227, %v1228
        %v1230 = vrot.slane %v1229, 1
        %v1231 = vmax.f32 %v1229, %v1230
        %s1232 = scalar_lea.vmem [#allocation2], 3
        %v1233 = vld [vmem:[%s1232] ss:$8 sm:$0x3]
        %v1236 = vcombine.low %v1210, %v1231
        %v1238 = vunpack.c.l.s4 1966171168
        %v1239 = vunpack.c.0.s8 %v1238
        %v1240 = vlaneseq
        %v1241 = vshrl.u32 %v1240, 7
        %v1242 = vsub.s32 %v1239, %v1241
        %v1243 = vrot.slane %v1236, %v1242
        %v1245 = vunpack.c.l.s4 1966171168
        %v1246 = vunpack.c.0.s8 %v1245
        %v1247 = vlaneseq
        %v1248 = vshrl.u32 %v1247, 7
        %v1249 = vsub.s32 %v1246, %v1248
        %v1250 = vrot.slane %v1243, %v1249
        %v1252 = vmax.f32 %v1233, %v1250
        %1253 = vst.msk [vmem:[%s1232] ss:$8 sm:$0x3] %vm673, %v1252
        %1254 = vst.msk [vmem:[%s1232] ss:$8 sm:$0x0] %vm673, %v1252
        %1255 = vset.pattern.permute.xlu0 4
        %1256 = vperm.xlu0 %1255, %v448
        %v1257 = vpop.permute.xlu0 %1256
        %1259 = vset.pattern.permute.xlu0 4
        %1260 = vperm.xlu0 %1259, %v449
        %v1261 = vpop.permute.xlu0 %1260
        %1263 = vset.pattern.permute.xlu0 4
        %1264 = vperm.xlu0 %1263, %v450
        %v1265 = vpop.permute.xlu0 %1264
        %1267 = vset.pattern.permute.xlu0 4
        %1268 = vperm.xlu0 %1267, %v451
        %v1269 = vpop.permute.xlu0 %1268
        %1271 = vset.pattern.permute.xlu0 4
        %1272 = vperm.xlu0 %1271, %v452
        %v1273 = vpop.permute.xlu0 %1272
        %1275 = vset.pattern.permute.xlu0 4
        %1276 = vperm.xlu0 %1275, %v453
        %v1277 = vpop.permute.xlu0 %1276
        %1279 = vset.pattern.permute.xlu0 4
        %1280 = vperm.xlu0 %1279, %v454
        %v1281 = vpop.permute.xlu0 %1280
        %1283 = vset.pattern.permute.xlu0 4
        %1284 = vperm.xlu0 %1283, %v455
        %v1285 = vpop.permute.xlu0 %1284
        %1287 = vset.pattern.permute.xlu0 4
        %1288 = vperm.xlu0 %1287, %v456
        %v1289 = vpop.permute.xlu0 %1288
        %1291 = vset.pattern.permute.xlu0 4
        %1292 = vperm.xlu0 %1291, %v457
        %v1293 = vpop.permute.xlu0 %1292
        %1295 = vset.pattern.permute.xlu0 4
        %1296 = vperm.xlu0 %1295, %v458
        %v1297 = vpop.permute.xlu0 %1296
        %1299 = vset.pattern.permute.xlu0 4
        %1300 = vperm.xlu0 %1299, %v459
        %v1301 = vpop.permute.xlu0 %1300
        %1303 = vset.pattern.permute.xlu0 4
        %1304 = vperm.xlu0 %1303, %v460
        %v1305 = vpop.permute.xlu0 %1304
        %1307 = vset.pattern.permute.xlu0 4
        %1308 = vperm.xlu0 %1307, %v461
        %v1309 = vpop.permute.xlu0 %1308
        %1311 = vset.pattern.permute.xlu0 4
        %1312 = vperm.xlu0 %1311, %v462
        %v1313 = vpop.permute.xlu0 %1312
        %1315 = vset.pattern.permute.xlu0 4
        %1316 = vperm.xlu0 %1315, %v463
        %v1317 = vpop.permute.xlu0 %1316
        %v1319 = vmul.f32 %v1257, %v352
        %v1320 = vmul.f32 %v1257, %v353
        %v1321 = vmul.f32 %v1261, %v354
        %v1322 = vmul.f32 %v1261, %v355
        %v1323 = vmul.f32 %v1265, %v356
        %v1324 = vmul.f32 %v1265, %v357
        %v1325 = vmul.f32 %v1269, %v358
        %v1326 = vmul.f32 %v1269, %v359
        %v1327 = vmul.f32 %v1273, %v360
        %v1328 = vmul.f32 %v1273, %v361
        %v1329 = vmul.f32 %v1277, %v362
        %v1330 = vmul.f32 %v1277, %v363
        %v1331 = vmul.f32 %v1281, %v364
        %v1332 = vmul.f32 %v1281, %v365
        %v1333 = vmul.f32 %v1285, %v366
        %v1334 = vmul.f32 %v1285, %v367
        %v1335 = vmul.f32 %v1289, %v368
        %v1336 = vmul.f32 %v1289, %v369
        %v1337 = vmul.f32 %v1293, %v370
        %v1338 = vmul.f32 %v1293, %v371
        %v1339 = vmul.f32 %v1297, %v372
        %v1340 = vmul.f32 %v1297, %v373
        %v1341 = vmul.f32 %v1301, %v374
        %v1342 = vmul.f32 %v1301, %v375
        %v1343 = vmul.f32 %v1305, %v376
        %v1344 = vmul.f32 %v1305, %v377
        %v1345 = vmul.f32 %v1309, %v378
        %v1346 = vmul.f32 %v1309, %v379
        %v1347 = vmul.f32 %v1313, %v380
        %v1348 = vmul.f32 %v1313, %v381
        %v1349 = vmul.f32 %v1317, %v382
        %v1350 = vmul.f32 %v1317, %v383
        %v1351 = vadd.f32 %v1319, %v416
        %v1352 = vadd.f32 %v1320, %v417
        %v1353 = vadd.f32 %v1321, %v418
        %v1354 = vadd.f32 %v1322, %v419
        %v1355 = vadd.f32 %v1323, %v420
        %v1356 = vadd.f32 %v1324, %v421
        %v1357 = vadd.f32 %v1325, %v422
        %v1358 = vadd.f32 %v1326, %v423
        %v1359 = vadd.f32 %v1327, %v424
        %v1360 = vadd.f32 %v1328, %v425
        %v1361 = vadd.f32 %v1329, %v426
        %v1362 = vadd.f32 %v1330, %v427
        %v1363 = vadd.f32 %v1331, %v428
        %v1364 = vadd.f32 %v1332, %v429
        %v1365 = vadd.f32 %v1333, %v430
        %v1366 = vadd.f32 %v1334, %v431
        %v1367 = vadd.f32 %v1335, %v432
        %v1368 = vadd.f32 %v1336, %v433
        %v1369 = vadd.f32 %v1337, %v434
        %v1370 = vadd.f32 %v1338, %v435
        %v1371 = vadd.f32 %v1339, %v436
        %v1372 = vadd.f32 %v1340, %v437
        %v1373 = vadd.f32 %v1341, %v438
        %v1374 = vadd.f32 %v1342, %v439
        %v1375 = vadd.f32 %v1343, %v440
        %v1376 = vadd.f32 %v1344, %v441
        %v1377 = vadd.f32 %v1345, %v442
        %v1378 = vadd.f32 %v1346, %v443
        %v1379 = vadd.f32 %v1347, %v444
        %v1380 = vadd.f32 %v1348, %v445
        %v1381 = vadd.f32 %v1349, %v446
        %v1382 = vadd.f32 %v1350, %v447
        %v1383 = vmax.f32 %v1351, %v1355
        %v1384 = vmax.f32 %v1353, %v1357
        %v1385 = vmax.f32 %v1383, %v1359
        %v1386 = vmax.f32 %v1384, %v1361
        %v1387 = vmax.f32 %v1385, %v1363
        %v1388 = vmax.f32 %v1386, %v1365
        %v1389 = vmax.f32 %v1387, %v1367
        %v1390 = vmax.f32 %v1388, %v1369
        %v1391 = vmax.f32 %v1389, %v1371
        %v1392 = vmax.f32 %v1390, %v1373
        %v1393 = vmax.f32 %v1391, %v1375
        %v1394 = vmax.f32 %v1392, %v1377
        %v1395 = vmax.f32 %v1393, %v1379
        %v1396 = vmax.f32 %v1394, %v1381
        %v1397 = vmax.f32 %v1395, %v1396
        %v1398 = vrot.slane %v1397, 4
        %v1399 = vmax.f32 %v1397, %v1398
        %v1400 = vrot.slane %v1399, 2
        %v1401 = vmax.f32 %v1399, %v1400
        %v1402 = vrot.slane %v1401, 1
        %v1403 = vmax.f32 %v1401, %v1402
        %v1404 = vmax.f32 %v1352, %v1356
        %v1405 = vmax.f32 %v1354, %v1358
        %v1406 = vmax.f32 %v1404, %v1360
        %v1407 = vmax.f32 %v1405, %v1362
        %v1408 = vmax.f32 %v1406, %v1364
        %v1409 = vmax.f32 %v1407, %v1366
        %v1410 = vmax.f32 %v1408, %v1368
        %v1411 = vmax.f32 %v1409, %v1370
        %v1412 = vmax.f32 %v1410, %v1372
        %v1413 = vmax.f32 %v1411, %v1374
        %v1414 = vmax.f32 %v1412, %v1376
        %v1415 = vmax.f32 %v1413, %v1378
        %v1416 = vmax.f32 %v1414, %v1380
        %v1417 = vmax.f32 %v1415, %v1382
        %v1418 = vmax.f32 %v1416, %v1417
        %v1419 = vrot.slane %v1418, 4
        %v1420 = vmax.f32 %v1418, %v1419
        %v1421 = vrot.slane %v1420, 2
        %v1422 = vmax.f32 %v1420, %v1421
        %v1423 = vrot.slane %v1422, 1
        %v1424 = vmax.f32 %v1422, %v1423
        %s1425 = scalar_lea.vmem [#allocation2], 4
        %v1426 = vld [vmem:[%s1425] ss:$8 sm:$0x3]
        %v1429 = vcombine.low %v1403, %v1424
        %v1431 = vunpack.c.l.s4 1966171168
        %v1432 = vunpack.c.0.s8 %v1431
        %v1433 = vlaneseq
        %v1434 = vshrl.u32 %v1433, 7
        %v1435 = vsub.s32 %v1432, %v1434
        %v1436 = vrot.slane %v1429, %v1435
        %v1438 = vunpack.c.l.s4 1966171168
        %v1439 = vunpack.c.0.s8 %v1438
        %v1440 = vlaneseq
        %v1441 = vshrl.u32 %v1440, 7
        %v1442 = vsub.s32 %v1439, %v1441
        %v1443 = vrot.slane %v1436, %v1442
        %v1445 = vmax.f32 %v1426, %v1443
        %1446 = vst.msk [vmem:[%s1425] ss:$8 sm:$0x3] %vm673, %v1445
        %1447 = vst.msk [vmem:[%s1425] ss:$8 sm:$0x0] %vm673, %v1445
        %1448 = vset.pattern.permute.xlu0 5
        %1449 = vperm.xlu0 %1448, %v448
        %v1450 = vpop.permute.xlu0 %1449
        %1452 = vset.pattern.permute.xlu0 5
        %1453 = vperm.xlu0 %1452, %v449
        %v1454 = vpop.permute.xlu0 %1453
        %1456 = vset.pattern.permute.xlu0 5
        %1457 = vperm.xlu0 %1456, %v450
        %v1458 = vpop.permute.xlu0 %1457
        %1460 = vset.pattern.permute.xlu0 5
        %1461 = vperm.xlu0 %1460, %v451
        %v1462 = vpop.permute.xlu0 %1461
        %1464 = vset.pattern.permute.xlu0 5
        %1465 = vperm.xlu0 %1464, %v452
        %v1466 = vpop.permute.xlu0 %1465
        %1468 = vset.pattern.permute.xlu0 5
        %1469 = vperm.xlu0 %1468, %v453
        %v1470 = vpop.permute.xlu0 %1469
        %1472 = vset.pattern.permute.xlu0 5
        %1473 = vperm.xlu0 %1472, %v454
        %v1474 = vpop.permute.xlu0 %1473
        %1476 = vset.pattern.permute.xlu0 5
        %1477 = vperm.xlu0 %1476, %v455
        %v1478 = vpop.permute.xlu0 %1477
        %1480 = vset.pattern.permute.xlu0 5
        %1481 = vperm.xlu0 %1480, %v456
        %v1482 = vpop.permute.xlu0 %1481
        %1484 = vset.pattern.permute.xlu0 5
        %1485 = vperm.xlu0 %1484, %v457
        %v1486 = vpop.permute.xlu0 %1485
        %1488 = vset.pattern.permute.xlu0 5
        %1489 = vperm.xlu0 %1488, %v458
        %v1490 = vpop.permute.xlu0 %1489
        %1492 = vset.pattern.permute.xlu0 5
        %1493 = vperm.xlu0 %1492, %v459
        %v1494 = vpop.permute.xlu0 %1493
        %1496 = vset.pattern.permute.xlu0 5
        %1497 = vperm.xlu0 %1496, %v460
        %v1498 = vpop.permute.xlu0 %1497
        %1500 = vset.pattern.permute.xlu0 5
        %1501 = vperm.xlu0 %1500, %v461
        %v1502 = vpop.permute.xlu0 %1501
        %1504 = vset.pattern.permute.xlu0 5
        %1505 = vperm.xlu0 %1504, %v462
        %v1506 = vpop.permute.xlu0 %1505
        %1508 = vset.pattern.permute.xlu0 5
        %1509 = vperm.xlu0 %1508, %v463
        %v1510 = vpop.permute.xlu0 %1509
        %v1512 = vmul.f32 %v1450, %v352
        %v1513 = vmul.f32 %v1450, %v353
        %v1514 = vmul.f32 %v1454, %v354
        %v1515 = vmul.f32 %v1454, %v355
        %v1516 = vmul.f32 %v1458, %v356
        %v1517 = vmul.f32 %v1458, %v357
        %v1518 = vmul.f32 %v1462, %v358
        %v1519 = vmul.f32 %v1462, %v359
        %v1520 = vmul.f32 %v1466, %v360
        %v1521 = vmul.f32 %v1466, %v361
        %v1522 = vmul.f32 %v1470, %v362
        %v1523 = vmul.f32 %v1470, %v363
        %v1524 = vmul.f32 %v1474, %v364
        %v1525 = vmul.f32 %v1474, %v365
        %v1526 = vmul.f32 %v1478, %v366
        %v1527 = vmul.f32 %v1478, %v367
        %v1528 = vmul.f32 %v1482, %v368
        %v1529 = vmul.f32 %v1482, %v369
        %v1530 = vmul.f32 %v1486, %v370
        %v1531 = vmul.f32 %v1486, %v371
        %v1532 = vmul.f32 %v1490, %v372
        %v1533 = vmul.f32 %v1490, %v373
        %v1534 = vmul.f32 %v1494, %v374
        %v1535 = vmul.f32 %v1494, %v375
        %v1536 = vmul.f32 %v1498, %v376
        %v1537 = vmul.f32 %v1498, %v377
        %v1538 = vmul.f32 %v1502, %v378
        %v1539 = vmul.f32 %v1502, %v379
        %v1540 = vmul.f32 %v1506, %v380
        %v1541 = vmul.f32 %v1506, %v381
        %v1542 = vmul.f32 %v1510, %v382
        %v1543 = vmul.f32 %v1510, %v383
        %v1544 = vadd.f32 %v1512, %v416
        %v1545 = vadd.f32 %v1513, %v417
        %v1546 = vadd.f32 %v1514, %v418
        %v1547 = vadd.f32 %v1515, %v419
        %v1548 = vadd.f32 %v1516, %v420
        %v1549 = vadd.f32 %v1517, %v421
        %v1550 = vadd.f32 %v1518, %v422
        %v1551 = vadd.f32 %v1519, %v423
        %v1552 = vadd.f32 %v1520, %v424
        %v1553 = vadd.f32 %v1521, %v425
        %v1554 = vadd.f32 %v1522, %v426
        %v1555 = vadd.f32 %v1523, %v427
        %v1556 = vadd.f32 %v1524, %v428
        %v1557 = vadd.f32 %v1525, %v429
        %v1558 = vadd.f32 %v1526, %v430
        %v1559 = vadd.f32 %v1527, %v431
        %v1560 = vadd.f32 %v1528, %v432
        %v1561 = vadd.f32 %v1529, %v433
        %v1562 = vadd.f32 %v1530, %v434
        %v1563 = vadd.f32 %v1531, %v435
        %v1564 = vadd.f32 %v1532, %v436
        %v1565 = vadd.f32 %v1533, %v437
        %v1566 = vadd.f32 %v1534, %v438
        %v1567 = vadd.f32 %v1535, %v439
        %v1568 = vadd.f32 %v1536, %v440
        %v1569 = vadd.f32 %v1537, %v441
        %v1570 = vadd.f32 %v1538, %v442
        %v1571 = vadd.f32 %v1539, %v443
        %v1572 = vadd.f32 %v1540, %v444
        %v1573 = vadd.f32 %v1541, %v445
        %v1574 = vadd.f32 %v1542, %v446
        %v1575 = vadd.f32 %v1543, %v447
        %v1576 = vmax.f32 %v1544, %v1548
        %v1577 = vmax.f32 %v1546, %v1550
        %v1578 = vmax.f32 %v1576, %v1552
        %v1579 = vmax.f32 %v1577, %v1554
        %v1580 = vmax.f32 %v1578, %v1556
        %v1581 = vmax.f32 %v1579, %v1558
        %v1582 = vmax.f32 %v1580, %v1560
        %v1583 = vmax.f32 %v1581, %v1562
        %v1584 = vmax.f32 %v1582, %v1564
        %v1585 = vmax.f32 %v1583, %v1566
        %v1586 = vmax.f32 %v1584, %v1568
        %v1587 = vmax.f32 %v1585, %v1570
        %v1588 = vmax.f32 %v1586, %v1572
        %v1589 = vmax.f32 %v1587, %v1574
        %v1590 = vmax.f32 %v1588, %v1589
        %v1591 = vrot.slane %v1590, 4
        %v1592 = vmax.f32 %v1590, %v1591
        %v1593 = vrot.slane %v1592, 2
        %v1594 = vmax.f32 %v1592, %v1593
        %v1595 = vrot.slane %v1594, 1
        %v1596 = vmax.f32 %v1594, %v1595
        %v1597 = vmax.f32 %v1545, %v1549
        %v1598 = vmax.f32 %v1547, %v1551
        %v1599 = vmax.f32 %v1597, %v1553
        %v1600 = vmax.f32 %v1598, %v1555
        %v1601 = vmax.f32 %v1599, %v1557
        %v1602 = vmax.f32 %v1600, %v1559
        %v1603 = vmax.f32 %v1601, %v1561
        %v1604 = vmax.f32 %v1602, %v1563
        %v1605 = vmax.f32 %v1603, %v1565
        %v1606 = vmax.f32 %v1604, %v1567
        %v1607 = vmax.f32 %v1605, %v1569
        %v1608 = vmax.f32 %v1606, %v1571
        %v1609 = vmax.f32 %v1607, %v1573
        %v1610 = vmax.f32 %v1608, %v1575
        %v1611 = vmax.f32 %v1609, %v1610
        %v1612 = vrot.slane %v1611, 4
        %v1613 = vmax.f32 %v1611, %v1612
        %v1614 = vrot.slane %v1613, 2
        %v1615 = vmax.f32 %v1613, %v1614
        %v1616 = vrot.slane %v1615, 1
        %v1617 = vmax.f32 %v1615, %v1616
        %s1618 = scalar_lea.vmem [#allocation2], 5
        %v1619 = vld [vmem:[%s1618] ss:$8 sm:$0x3]
        %v1622 = vcombine.low %v1596, %v1617
        %v1624 = vunpack.c.l.s4 1966171168
        %v1625 = vunpack.c.0.s8 %v1624
        %v1626 = vlaneseq
        %v1627 = vshrl.u32 %v1626, 7
        %v1628 = vsub.s32 %v1625, %v1627
        %v1629 = vrot.slane %v1622, %v1628
        %v1631 = vunpack.c.l.s4 1966171168
        %v1632 = vunpack.c.0.s8 %v1631
        %v1633 = vlaneseq
        %v1634 = vshrl.u32 %v1633, 7
        %v1635 = vsub.s32 %v1632, %v1634
        %v1636 = vrot.slane %v1629, %v1635
        %v1638 = vmax.f32 %v1619, %v1636
        %1639 = vst.msk [vmem:[%s1618] ss:$8 sm:$0x3] %vm673, %v1638
        %1640 = vst.msk [vmem:[%s1618] ss:$8 sm:$0x0] %vm673, %v1638
        %1641 = vset.pattern.permute.xlu0 6
        %1642 = vperm.xlu0 %1641, %v448
        %v1643 = vpop.permute.xlu0 %1642
        %1645 = vset.pattern.permute.xlu0 6
        %1646 = vperm.xlu0 %1645, %v449
        %v1647 = vpop.permute.xlu0 %1646
        %1649 = vset.pattern.permute.xlu0 6
        %1650 = vperm.xlu0 %1649, %v450
        %v1651 = vpop.permute.xlu0 %1650
        %1653 = vset.pattern.permute.xlu0 6
        %1654 = vperm.xlu0 %1653, %v451
        %v1655 = vpop.permute.xlu0 %1654
        %1657 = vset.pattern.permute.xlu0 6
        %1658 = vperm.xlu0 %1657, %v452
        %v1659 = vpop.permute.xlu0 %1658
        %1661 = vset.pattern.permute.xlu0 6
        %1662 = vperm.xlu0 %1661, %v453
        %v1663 = vpop.permute.xlu0 %1662
        %1665 = vset.pattern.permute.xlu0 6
        %1666 = vperm.xlu0 %1665, %v454
        %v1667 = vpop.permute.xlu0 %1666
        %1669 = vset.pattern.permute.xlu0 6
        %1670 = vperm.xlu0 %1669, %v455
        %v1671 = vpop.permute.xlu0 %1670
        %1673 = vset.pattern.permute.xlu0 6
        %1674 = vperm.xlu0 %1673, %v456
        %v1675 = vpop.permute.xlu0 %1674
        %1677 = vset.pattern.permute.xlu0 6
        %1678 = vperm.xlu0 %1677, %v457
        %v1679 = vpop.permute.xlu0 %1678
        %1681 = vset.pattern.permute.xlu0 6
        %1682 = vperm.xlu0 %1681, %v458
        %v1683 = vpop.permute.xlu0 %1682
        %1685 = vset.pattern.permute.xlu0 6
        %1686 = vperm.xlu0 %1685, %v459
        %v1687 = vpop.permute.xlu0 %1686
        %1689 = vset.pattern.permute.xlu0 6
        %1690 = vperm.xlu0 %1689, %v460
        %v1691 = vpop.permute.xlu0 %1690
        %1693 = vset.pattern.permute.xlu0 6
        %1694 = vperm.xlu0 %1693, %v461
        %v1695 = vpop.permute.xlu0 %1694
        %1697 = vset.pattern.permute.xlu0 6
        %1698 = vperm.xlu0 %1697, %v462
        %v1699 = vpop.permute.xlu0 %1698
        %1701 = vset.pattern.permute.xlu0 6
        %1702 = vperm.xlu0 %1701, %v463
        %v1703 = vpop.permute.xlu0 %1702
        %v1705 = vmul.f32 %v1643, %v352
        %v1706 = vmul.f32 %v1643, %v353
        %v1707 = vmul.f32 %v1647, %v354
        %v1708 = vmul.f32 %v1647, %v355
        %v1709 = vmul.f32 %v1651, %v356
        %v1710 = vmul.f32 %v1651, %v357
        %v1711 = vmul.f32 %v1655, %v358
        %v1712 = vmul.f32 %v1655, %v359
        %v1713 = vmul.f32 %v1659, %v360
        %v1714 = vmul.f32 %v1659, %v361
        %v1715 = vmul.f32 %v1663, %v362
        %v1716 = vmul.f32 %v1663, %v363
        %v1717 = vmul.f32 %v1667, %v364
        %v1718 = vmul.f32 %v1667, %v365
        %v1719 = vmul.f32 %v1671, %v366
        %v1720 = vmul.f32 %v1671, %v367
        %v1721 = vmul.f32 %v1675, %v368
        %v1722 = vmul.f32 %v1675, %v369
        %v1723 = vmul.f32 %v1679, %v370
        %v1724 = vmul.f32 %v1679, %v371
        %v1725 = vmul.f32 %v1683, %v372
        %v1726 = vmul.f32 %v1683, %v373
        %v1727 = vmul.f32 %v1687, %v374
        %v1728 = vmul.f32 %v1687, %v375
        %v1729 = vmul.f32 %v1691, %v376
        %v1730 = vmul.f32 %v1691, %v377
        %v1731 = vmul.f32 %v1695, %v378
        %v1732 = vmul.f32 %v1695, %v379
        %v1733 = vmul.f32 %v1699, %v380
        %v1734 = vmul.f32 %v1699, %v381
        %v1735 = vmul.f32 %v1703, %v382
        %v1736 = vmul.f32 %v1703, %v383
        %v1737 = vadd.f32 %v1705, %v416
        %v1738 = vadd.f32 %v1706, %v417
        %v1739 = vadd.f32 %v1707, %v418
        %v1740 = vadd.f32 %v1708, %v419
        %v1741 = vadd.f32 %v1709, %v420
        %v1742 = vadd.f32 %v1710, %v421
        %v1743 = vadd.f32 %v1711, %v422
        %v1744 = vadd.f32 %v1712, %v423
        %v1745 = vadd.f32 %v1713, %v424
        %v1746 = vadd.f32 %v1714, %v425
        %v1747 = vadd.f32 %v1715, %v426
        %v1748 = vadd.f32 %v1716, %v427
        %v1749 = vadd.f32 %v1717, %v428
        %v1750 = vadd.f32 %v1718, %v429
        %v1751 = vadd.f32 %v1719, %v430
        %v1752 = vadd.f32 %v1720, %v431
        %v1753 = vadd.f32 %v1721, %v432
        %v1754 = vadd.f32 %v1722, %v433
        %v1755 = vadd.f32 %v1723, %v434
        %v1756 = vadd.f32 %v1724, %v435
        %v1757 = vadd.f32 %v1725, %v436
        %v1758 = vadd.f32 %v1726, %v437
        %v1759 = vadd.f32 %v1727, %v438
        %v1760 = vadd.f32 %v1728, %v439
        %v1761 = vadd.f32 %v1729, %v440
        %v1762 = vadd.f32 %v1730, %v441
        %v1763 = vadd.f32 %v1731, %v442
        %v1764 = vadd.f32 %v1732, %v443
        %v1765 = vadd.f32 %v1733, %v444
        %v1766 = vadd.f32 %v1734, %v445
        %v1767 = vadd.f32 %v1735, %v446
        %v1768 = vadd.f32 %v1736, %v447
        %v1769 = vmax.f32 %v1737, %v1741
        %v1770 = vmax.f32 %v1739, %v1743
        %v1771 = vmax.f32 %v1769, %v1745
        %v1772 = vmax.f32 %v1770, %v1747
        %v1773 = vmax.f32 %v1771, %v1749
        %v1774 = vmax.f32 %v1772, %v1751
        %v1775 = vmax.f32 %v1773, %v1753
        %v1776 = vmax.f32 %v1774, %v1755
        %v1777 = vmax.f32 %v1775, %v1757
        %v1778 = vmax.f32 %v1776, %v1759
        %v1779 = vmax.f32 %v1777, %v1761
        %v1780 = vmax.f32 %v1778, %v1763
        %v1781 = vmax.f32 %v1779, %v1765
        %v1782 = vmax.f32 %v1780, %v1767
        %v1783 = vmax.f32 %v1781, %v1782
        %v1784 = vrot.slane %v1783, 4
        %v1785 = vmax.f32 %v1783, %v1784
        %v1786 = vrot.slane %v1785, 2
        %v1787 = vmax.f32 %v1785, %v1786
        %v1788 = vrot.slane %v1787, 1
        %v1789 = vmax.f32 %v1787, %v1788
        %v1790 = vmax.f32 %v1738, %v1742
        %v1791 = vmax.f32 %v1740, %v1744
        %v1792 = vmax.f32 %v1790, %v1746
        %v1793 = vmax.f32 %v1791, %v1748
        %v1794 = vmax.f32 %v1792, %v1750
        %v1795 = vmax.f32 %v1793, %v1752
        %v1796 = vmax.f32 %v1794, %v1754
        %v1797 = vmax.f32 %v1795, %v1756
        %v1798 = vmax.f32 %v1796, %v1758
        %v1799 = vmax.f32 %v1797, %v1760
        %v1800 = vmax.f32 %v1798, %v1762
        %v1801 = vmax.f32 %v1799, %v1764
        %v1802 = vmax.f32 %v1800, %v1766
        %v1803 = vmax.f32 %v1801, %v1768
        %v1804 = vmax.f32 %v1802, %v1803
        %v1805 = vrot.slane %v1804, 4
        %v1806 = vmax.f32 %v1804, %v1805
        %v1807 = vrot.slane %v1806, 2
        %v1808 = vmax.f32 %v1806, %v1807
        %v1809 = vrot.slane %v1808, 1
        %v1810 = vmax.f32 %v1808, %v1809
        %s1811 = scalar_lea.vmem [#allocation2], 6
        %v1812 = vld [vmem:[%s1811] ss:$8 sm:$0x3]
        %v1815 = vcombine.low %v1789, %v1810
        %v1817 = vunpack.c.l.s4 1966171168
        %v1818 = vunpack.c.0.s8 %v1817
        %v1819 = vlaneseq
        %v1820 = vshrl.u32 %v1819, 7
        %v1821 = vsub.s32 %v1818, %v1820
        %v1822 = vrot.slane %v1815, %v1821
        %v1824 = vunpack.c.l.s4 1966171168
        %v1825 = vunpack.c.0.s8 %v1824
        %v1826 = vlaneseq
        %v1827 = vshrl.u32 %v1826, 7
        %v1828 = vsub.s32 %v1825, %v1827
        %v1829 = vrot.slane %v1822, %v1828
        %v1831 = vmax.f32 %v1812, %v1829
        %1832 = vst.msk [vmem:[%s1811] ss:$8 sm:$0x3] %vm673, %v1831
        %1833 = vst.msk [vmem:[%s1811] ss:$8 sm:$0x0] %vm673, %v1831
        %1834 = vset.pattern.permute.xlu0 7
        %1835 = vperm.xlu0 %1834, %v448
        %v1836 = vpop.permute.xlu0 %1835
        %1838 = vset.pattern.permute.xlu0 7
        %1839 = vperm.xlu0 %1838, %v449
        %v1840 = vpop.permute.xlu0 %1839
        %1842 = vset.pattern.permute.xlu0 7
        %1843 = vperm.xlu0 %1842, %v450
        %v1844 = vpop.permute.xlu0 %1843
        %1846 = vset.pattern.permute.xlu0 7
        %1847 = vperm.xlu0 %1846, %v451
        %v1848 = vpop.permute.xlu0 %1847
        %1850 = vset.pattern.permute.xlu0 7
        %1851 = vperm.xlu0 %1850, %v452
        %v1852 = vpop.permute.xlu0 %1851
        %1854 = vset.pattern.permute.xlu0 7
        %1855 = vperm.xlu0 %1854, %v453
        %v1856 = vpop.permute.xlu0 %1855
        %1858 = vset.pattern.permute.xlu0 7
        %1859 = vperm.xlu0 %1858, %v454
        %v1860 = vpop.permute.xlu0 %1859
        %1862 = vset.pattern.permute.xlu0 7
        %1863 = vperm.xlu0 %1862, %v455
        %v1864 = vpop.permute.xlu0 %1863
        %1866 = vset.pattern.permute.xlu0 7
        %1867 = vperm.xlu0 %1866, %v456
        %v1868 = vpop.permute.xlu0 %1867
        %1870 = vset.pattern.permute.xlu0 7
        %1871 = vperm.xlu0 %1870, %v457
        %v1872 = vpop.permute.xlu0 %1871
        %1874 = vset.pattern.permute.xlu0 7
        %1875 = vperm.xlu0 %1874, %v458
        %v1876 = vpop.permute.xlu0 %1875
        %1878 = vset.pattern.permute.xlu0 7
        %1879 = vperm.xlu0 %1878, %v459
        %v1880 = vpop.permute.xlu0 %1879
        %1882 = vset.pattern.permute.xlu0 7
        %1883 = vperm.xlu0 %1882, %v460
        %v1884 = vpop.permute.xlu0 %1883
        %1886 = vset.pattern.permute.xlu0 7
        %1887 = vperm.xlu0 %1886, %v461
        %v1888 = vpop.permute.xlu0 %1887
        %1890 = vset.pattern.permute.xlu0 7
        %1891 = vperm.xlu0 %1890, %v462
        %v1892 = vpop.permute.xlu0 %1891
        %1894 = vset.pattern.permute.xlu0 7
        %1895 = vperm.xlu0 %1894, %v463
        %v1896 = vpop.permute.xlu0 %1895
        %v1898 = vmul.f32 %v1836, %v352
        %v1899 = vmul.f32 %v1836, %v353
        %v1900 = vmul.f32 %v1840, %v354
        %v1901 = vmul.f32 %v1840, %v355
        %v1902 = vmul.f32 %v1844, %v356
        %v1903 = vmul.f32 %v1844, %v357
        %v1904 = vmul.f32 %v1848, %v358
        %v1905 = vmul.f32 %v1848, %v359
        %v1906 = vmul.f32 %v1852, %v360
        %v1907 = vmul.f32 %v1852, %v361
        %v1908 = vmul.f32 %v1856, %v362
        %v1909 = vmul.f32 %v1856, %v363
        %v1910 = vmul.f32 %v1860, %v364
        %v1911 = vmul.f32 %v1860, %v365
        %v1912 = vmul.f32 %v1864, %v366
        %v1913 = vmul.f32 %v1864, %v367
        %v1914 = vmul.f32 %v1868, %v368
        %v1915 = vmul.f32 %v1868, %v369
        %v1916 = vmul.f32 %v1872, %v370
        %v1917 = vmul.f32 %v1872, %v371
        %v1918 = vmul.f32 %v1876, %v372
        %v1919 = vmul.f32 %v1876, %v373
        %v1920 = vmul.f32 %v1880, %v374
        %v1921 = vmul.f32 %v1880, %v375
        %v1922 = vmul.f32 %v1884, %v376
        %v1923 = vmul.f32 %v1884, %v377
        %v1924 = vmul.f32 %v1888, %v378
        %v1925 = vmul.f32 %v1888, %v379
        %v1926 = vmul.f32 %v1892, %v380
        %v1927 = vmul.f32 %v1892, %v381
        %v1928 = vmul.f32 %v1896, %v382
        %v1929 = vmul.f32 %v1896, %v383
        %v1930 = vadd.f32 %v1898, %v416
        %v1931 = vadd.f32 %v1899, %v417
        %v1932 = vadd.f32 %v1900, %v418
        %v1933 = vadd.f32 %v1901, %v419
        %v1934 = vadd.f32 %v1902, %v420
        %v1935 = vadd.f32 %v1903, %v421
        %v1936 = vadd.f32 %v1904, %v422
        %v1937 = vadd.f32 %v1905, %v423
        %v1938 = vadd.f32 %v1906, %v424
        %v1939 = vadd.f32 %v1907, %v425
        %v1940 = vadd.f32 %v1908, %v426
        %v1941 = vadd.f32 %v1909, %v427
        %v1942 = vadd.f32 %v1910, %v428
        %v1943 = vadd.f32 %v1911, %v429
        %v1944 = vadd.f32 %v1912, %v430
        %v1945 = vadd.f32 %v1913, %v431
        %v1946 = vadd.f32 %v1914, %v432
        %v1947 = vadd.f32 %v1915, %v433
        %v1948 = vadd.f32 %v1916, %v434
        %v1949 = vadd.f32 %v1917, %v435
        %v1950 = vadd.f32 %v1918, %v436
        %v1951 = vadd.f32 %v1919, %v437
        %v1952 = vadd.f32 %v1920, %v438
        %v1953 = vadd.f32 %v1921, %v439
        %v1954 = vadd.f32 %v1922, %v440
        %v1955 = vadd.f32 %v1923, %v441
        %v1956 = vadd.f32 %v1924, %v442
        %v1957 = vadd.f32 %v1925, %v443
        %v1958 = vadd.f32 %v1926, %v444
        %v1959 = vadd.f32 %v1927, %v445
        %v1960 = vadd.f32 %v1928, %v446
        %v1961 = vadd.f32 %v1929, %v447
        %v1962 = vmax.f32 %v1930, %v1934
        %v1963 = vmax.f32 %v1932, %v1936
        %v1964 = vmax.f32 %v1962, %v1938
        %v1965 = vmax.f32 %v1963, %v1940
        %v1966 = vmax.f32 %v1964, %v1942
        %v1967 = vmax.f32 %v1965, %v1944
        %v1968 = vmax.f32 %v1966, %v1946
        %v1969 = vmax.f32 %v1967, %v1948
        %v1970 = vmax.f32 %v1968, %v1950
        %v1971 = vmax.f32 %v1969, %v1952
        %v1972 = vmax.f32 %v1970, %v1954
        %v1973 = vmax.f32 %v1971, %v1956
        %v1974 = vmax.f32 %v1972, %v1958
        %v1975 = vmax.f32 %v1973, %v1960
        %v1976 = vmax.f32 %v1974, %v1975
        %v1977 = vrot.slane %v1976, 4
        %v1978 = vmax.f32 %v1976, %v1977
        %v1979 = vrot.slane %v1978, 2
        %v1980 = vmax.f32 %v1978, %v1979
        %v1981 = vrot.slane %v1980, 1
        %v1982 = vmax.f32 %v1980, %v1981
        %v1983 = vmax.f32 %v1931, %v1935
        %v1984 = vmax.f32 %v1933, %v1937
        %v1985 = vmax.f32 %v1983, %v1939
        %v1986 = vmax.f32 %v1984, %v1941
        %v1987 = vmax.f32 %v1985, %v1943
        %v1988 = vmax.f32 %v1986, %v1945
        %v1989 = vmax.f32 %v1987, %v1947
        %v1990 = vmax.f32 %v1988, %v1949
        %v1991 = vmax.f32 %v1989, %v1951
        %v1992 = vmax.f32 %v1990, %v1953
        %v1993 = vmax.f32 %v1991, %v1955
        %v1994 = vmax.f32 %v1992, %v1957
        %v1995 = vmax.f32 %v1993, %v1959
        %v1996 = vmax.f32 %v1994, %v1961
        %v1997 = vmax.f32 %v1995, %v1996
        %v1998 = vrot.slane %v1997, 4
        %v1999 = vmax.f32 %v1997, %v1998
        %v2000 = vrot.slane %v1999, 2
        %v2001 = vmax.f32 %v1999, %v2000
        %v2002 = vrot.slane %v2001, 1
        %v2003 = vmax.f32 %v2001, %v2002
        %s2004 = scalar_lea.vmem [#allocation2], 7
        %v2005 = vld [vmem:[%s2004] ss:$8 sm:$0x3]
        %v2008 = vcombine.low %v1982, %v2003
        %v2010 = vunpack.c.l.s4 1966171168
        %v2011 = vunpack.c.0.s8 %v2010
        %v2012 = vlaneseq
        %v2013 = vshrl.u32 %v2012, 7
        %v2014 = vsub.s32 %v2011, %v2013
        %v2015 = vrot.slane %v2008, %v2014
        %v2017 = vunpack.c.l.s4 1966171168
        %v2018 = vunpack.c.0.s8 %v2017
        %v2019 = vlaneseq
        %v2020 = vshrl.u32 %v2019, 7
        %v2021 = vsub.s32 %v2018, %v2020
        %v2022 = vrot.slane %v2015, %v2021
        %v2024 = vmax.f32 %v2005, %v2022
        %2025 = vst.msk [vmem:[%s2004] ss:$8 sm:$0x3] %vm673, %v2024
        %2026 = vst.msk [vmem:[%s2004] ss:$8 sm:$0x0] %vm673, %v2024
        %p2027 = scmp.eq.s32.totalorder %s26, 1
        // Predicated region
        $region53: #{tpu_custom_call.1} parent=43 // pred_check
          %p2028 = pneg %p2027
        $region54: #{tpu_custom_call.1} parent=43 // pred_check_branch
          %2030 = sbr.rel (%p2028) target = $region56
        $region55: #{tpu_custom_call.1} parent=43 // pred_region
          %v2031 = vld [vmem:[%s338] sm:$0xff]
          %v2032 = vld [vmem:[%s338 + $0x8] sm:$0xff]
          %v2033 = vld [vmem:[%s343] sm:$0x3]
          %vm2034 = vcmp.gt.f32.partialorder %v2033, 0.0
          %v2035 = vld [vmem:[#allocation2] sm:$0xff]
          %v2036 = vld [vmem:[#allocation2 + $0x8] sm:$0xff]
          %v2037 = vsel %vm2034, 1, 0
          %v2038 = vlaneseq
          %v2039 = vshrl.u32 %v2038, 7
          %v2040 = vsub.s32 0, %v2039
          %v2041 = vrot.slane %v2037, %v2040
          %v2042 = vlaneseq
          %v2043 = vshrl.u32 %v2042, 7
          %v2044 = vsub.s32 1, %v2043
          %v2045 = vrot.slane %v2037, %v2044
          %vm2046 = vcmp.eq.s32.totalorder %v2041, 1
          %vm2047 = vcmp.eq.s32.totalorder %v2045, 1
          %v2048 = vsel %vm2046, %v2035, 0.0
          %v2049 = vsel %vm2047, %v2036, 0.0
          %v2050 = vadd.f32 %v2031, %v2048
          %v2051 = vadd.f32 %v2032, %v2049
          %v2052 = vld [vmem:[%s4] sm:$0xff]
          %v2053 = vld [vmem:[%s4 + $0x8] sm:$0xff]
          %v2054 = vld [vmem:[%s4 + $0x10] sm:$0xff]
          %v2055 = vld [vmem:[%s4 + $0x18] sm:$0xff]
          %v2056 = vld [vmem:[%s5] sm:$0xff]
          %v2057 = vld [vmem:[%s5 + $0x8] sm:$0xff]
          %v2058 = vld [vmem:[%s5 + $0x10] sm:$0xff]
          %v2059 = vld [vmem:[%s5 + $0x18] sm:$0xff]
          %2061 = vset.pattern.permute.xlu0 0
          %2062 = vperm.xlu0 %2061, %v2056
          %v2063 = vpop.permute.xlu0 %2062
          %2066 = vset.pattern.permute.xlu0 0
          %2067 = vperm.xlu0 %2066, %v2057
          %v2068 = vpop.permute.xlu0 %2067
          %2071 = vset.pattern.permute.xlu0 0
          %2072 = vperm.xlu0 %2071, %v2058
          %v2073 = vpop.permute.xlu0 %2072
          %2076 = vset.pattern.permute.xlu0 0
          %2077 = vperm.xlu0 %2076, %v2059
          %v2078 = vpop.permute.xlu0 %2077
          %vm2080 = vcmask 64512
          %v2082 = vsel %vm2080, %v2052, 0
          %v2085 = vsel %vm2080, %v2053, 0
          %v2088 = vsel %vm2080, %v2054, 0
          %v2091 = vsel %vm2080, %v2055, 0
          %2093 = vmatprep.subr.mxu0 0.0
          %2094 = vmatpush1.msra.mxu0 0.0
          %2095 = vmatprep.subr.mxu0 0.0
          %2096 = vmatpush1.msra.mxu0 0.0
          %2097 = vmatprep.subr.mxu0 0.0
          %2098 = vmatpush1.msra.mxu0 0.0
          %2099 = vmatprep.subr.mxu0 0.0
          %2100 = vmatpush1.msra.mxu0 0.0
          %2101 = vmatprep.subr.mxu0 0.0
          %2102 = vmatpush1.msra.mxu0 0.0
          %2103 = vmatprep.subr.mxu0 0.0
          %2104 = vmatpush1.msra.mxu0 0.0
          %2105 = vmatprep.subr.mxu0 0.0
          %2106 = vmatpush1.msra.mxu0 0.0
          %2107 = vmatprep.subr.mxu0 0.0
          %2108 = vmatpush1.msra.mxu0 0.0
          %2109 = vmatprep.subr.mxu0 0.0
          %2110 = vmatpush1.msra.mxu0 0.0
          %2111 = vmatprep.subr.mxu0 0.0
          %2112 = vmatpush1.msra.mxu0 0.0
          %2113 = vmatprep.subr.mxu0 0.0
          %2114 = vmatpush1.msra.mxu0 0.0
          %2115 = vmatprep.subr.mxu0 0.0
          %2116 = vmatpush1.msra.mxu0 0.0
          %2117 = vmatprep.subr.mxu0 0.0
          %2118 = vmatpush1.msra.mxu0 0.0
          %2119 = vmatprep.subr.mxu0 0.0
          %2120 = vmatpush1.msra.mxu0 0.0
          %2121 = vmatprep.subr.mxu0 0.0
          %2122 = vmatpush1.msra.mxu0 0.0
          %2123 = vmatprep.subr.mxu0 %v2051
          %2124 = vmatpush1.msra.mxu0 %v2050
          %2125 = vmatprep.subr.mxu0 0.0
          %2126 = vmatpush2.msra.mxu0 0.0
          %2127 = vmatprep.subr.mxu0 0.0
          %2128 = vmatpush2.msra.mxu0 0.0
          %2129 = vmatprep.subr.mxu0 0.0
          %2130 = vmatpush2.msra.mxu0 0.0
          %2131 = vmatprep.subr.mxu0 0.0
          %2132 = vmatpush2.msra.mxu0 0.0
          %2133 = vmatprep.subr.mxu0 0.0
          %2134 = vmatpush2.msra.mxu0 0.0
          %2135 = vmatprep.subr.mxu0 0.0
          %2136 = vmatpush2.msra.mxu0 0.0
          %2137 = vmatprep.subr.mxu0 0.0
          %2138 = vmatpush2.msra.mxu0 0.0
          %2139 = vmatprep.subr.mxu0 0.0
          %2140 = vmatpush2.msra.mxu0 0.0
          %2141 = vmatprep.subr.mxu0 0.0
          %2142 = vmatpush2.msra.mxu0 0.0
          %2143 = vmatprep.subr.mxu0 0.0
          %2144 = vmatpush2.msra.mxu0 0.0
          %2145 = vmatprep.subr.mxu0 0.0
          %2146 = vmatpush2.msra.mxu0 0.0
          %2147 = vmatprep.subr.mxu0 0.0
          %2148 = vmatpush2.msra.mxu0 0.0
          %2149 = vmatprep.subr.mxu0 0.0
          %2150 = vmatpush2.msra.mxu0 0.0
          %2151 = vmatprep.subr.mxu0 0.0
          %2152 = vmatpush2.msra.mxu0 0.0
          %2153 = vmatprep.subr.mxu0 0.0
          %2154 = vmatpush2.msra.mxu0 0.0
          %2155 = vmatprep.subr.mxu0 0.0
          %2156 = vmatpush2.msra.mxu0 0.0
          %2157 = vmatprep.mubr.f32.mxu0 0.0
          %2158 = vmatmul.mubr.f32.gmra.mxu0 %v2082
          %v2159 = vpop.f32.mrf.mxu0
          %v2160 = vadd.f32 %v2063, %v2159
          %v2161 = vpop.f32.mrf.mxu0
          %v2162 = vadd.f32 %v2063, %v2161
          %2163 = vmatprep.mubr.f32.mxu0 0.0
          %2164 = vmatmul.mubr.f32.gmra.mxu0 %v2085
          %v2165 = vpop.f32.mrf.mxu0
          %v2166 = vadd.f32 %v2068, %v2165
          %v2167 = vpop.f32.mrf.mxu0
          %v2168 = vadd.f32 %v2068, %v2167
          %2169 = vmatprep.mubr.f32.mxu0 0.0
          %2170 = vmatmul.mubr.f32.gmra.mxu0 %v2088
          %v2171 = vpop.f32.mrf.mxu0
          %v2172 = vadd.f32 %v2073, %v2171
          %v2173 = vpop.f32.mrf.mxu0
          %v2174 = vadd.f32 %v2073, %v2173
          %2175 = vmatprep.mubr.f32.mxu0 0.0
          %2176 = vmatmul.mubr.f32.gmra.mxu0 %v2091
          %v2177 = vpop.f32.mrf.mxu0
          %v2178 = vadd.f32 %v2078, %v2177
          %v2179 = vpop.f32.mrf.mxu0
          %v2180 = vadd.f32 %v2078, %v2179
          %2181 = vdwg.mxu0
          %v2182 = vmax.f32 %v2160, 0.0
          %v2183 = vmax.f32 %v2162, 0.0
          %v2184 = vmax.f32 %v2166, 0.0
          %v2185 = vmax.f32 %v2168, 0.0
          %v2186 = vmax.f32 %v2172, 0.0
          %v2187 = vmax.f32 %v2174, 0.0
          %v2188 = vmax.f32 %v2178, 0.0
          %v2189 = vmax.f32 %v2180, 0.0
          %2190 = vst [vmem:[#allocation6] sm:$0xff] %v2182
          %2191 = vst [vmem:[#allocation6 + $0x8] sm:$0xff] %v2183
          %2192 = vst [vmem:[#allocation6 + $0x10] sm:$0xff] %v2184
          %2193 = vst [vmem:[#allocation6 + $0x18] sm:$0xff] %v2185
          %2194 = vst [vmem:[#allocation6 + $0x20] sm:$0xff] %v2186
          %2195 = vst [vmem:[#allocation6 + $0x28] sm:$0xff] %v2187
          %2196 = vst [vmem:[#allocation6 + $0x30] sm:$0xff] %v2188
          %2197 = vst [vmem:[#allocation6 + $0x38] sm:$0xff] %v2189
        $region56: #{tpu_custom_call.1} parent=43 // pred_fallthru
          _
        // Predicated region
        $region57: #{tpu_custom_call.1} parent=43 // pred_check
          %p2198 = pneg %p199
        $region58: #{tpu_custom_call.1} parent=43 // pred_check_branch
          %2200 = sbr.rel (%p2198) target = $region60
        $region59: #{tpu_custom_call.1} parent=43 // pred_region
          %s2201 = smul.u32 2, %s25
          %s2203 = ssub.s32 1024, 1024
          %2204 = vsyncadd [#allocation5], %s2203
          %s2205 = smul.addr %s2201, 128
          %s2206 = scalar_lea.hbm %s6, %s2205
          %s2207 = sshll.u32 [#allocation6], 4
          %s2208 = int_to_ptr.vmem [resolvable:$true] %s2207
          %2213 = dma.vmem_to_hbm [thread:$0]  %s2208, 1024, %s2206, [#allocation5], 256, 256, 16
        $region60: #{tpu_custom_call.1} parent=43 // pred_fallthru
          _
        // Predicated region
        $region61: #{tpu_custom_call.1} parent=43 // pred_check
          %p2214 = pneg %p199
        $region62: #{tpu_custom_call.1} parent=43 // pred_check_branch
          %2216 = sbr.rel (%p2214) target = $region64
        $region63: #{tpu_custom_call.1} parent=43 // pred_region
          %2217 = dma.done [#allocation5], 1024
        $region64: #{tpu_custom_call.1} parent=43 // pred_fallthru
          _
      $region44: #{tpu_custom_call.1} parent=5 // pred_fallthru
        _
      %p2218 = scmp.le.s32.totalorder 2, %s16
      // Predicated region
      $region65: #{tpu_custom_call.1} parent=5 // pred_check
        %p2219 = pneg %p2218
      $region66: #{tpu_custom_call.1} parent=5 // pred_check_branch
        %2221 = sbr.rel (%p2219) target = $region68
      $region67: #{tpu_custom_call.1} parent=5 // pred_region
        %s2222 = ssub.s32 %s16, 2
      $region68: #{tpu_custom_call.1} parent=5 // pred_fallthru
        _
    $region6: #{tpu_custom_call.1} parent=1 // loop_footer
      %s20 = sadd.s32 1, %s16
    $region7: #{tpu_custom_call.1} parent=1 // loop_footer_branch
      %15 = sbr.rel target = $region3
    $region8: #{tpu_custom_call.1} parent=1 // loop_exit
      _
    %2223 = vsyncpa [#allocation4], 1
    %s2224 = scalar_lea.sflag [#allocation4], 1
    %2225 = vsyncpa %s2224, 1
    %2226 = vsyncpa [#allocation5], 1
    %s2227 = scalar_lea.sflag [#allocation5], 1
    %2228 = vsyncpa %s2227, 1

</llo_original>
